<compile_context>
chip_gen: v7x
topology: tpu7x:2x2x1
jax: 0.10.0
libtpu: 0.0.40
codegen_flags: <defaults>
</compile_context>

<pallas_src>
import functools

import jax
import jax.numpy as jnp
from jax.experimental import pallas as pl
from jax.experimental.pallas import tpu as pltpu

ENCODE_LEN_FULL = 1253446      # real model size; the test below uses a small K
H1, H2, H3, H4 = 128, 64, 32, 1


def _round_up(x, m):
    return (x + m - 1) // m * m


# ----------------------------------------------------------------------------
# Kernel
# ----------------------------------------------------------------------------
def nnue_kernel(x_ref, we_ref, be_ref,
                w1_ref, b1_ref,
                w2_ref, b2_ref,
                w3_ref, b3_ref,
                out_ref, acc_ref, *, rem):
    k = pl.program_id(0)
    nk = pl.num_programs(0)
    tk = we_ref.shape[0]

    @pl.when(k == 0)
    def _():
        acc_ref[...] = jnp.zeros_like(acc_ref)

    # Cast the raw int8 feature tile to bf16 in-kernel (VPU has slack in this
    # DMA-bound kernel); encode matmul runs bf16 x bf16 on the MXU with f32
    # accumulation into the resident VMEM accumulator.
    if rem == tk:
        # Padded K divides the tile: every step is a full (B,tk) x (tk,H1).
        x_tile = x_ref[...].astype(jnp.bfloat16)
        acc_ref[...] += jnp.dot(x_tile, we_ref[...],
                                preferred_element_type=jnp.float32)
    else:
        # cdiv grid: the last block is partially out-of-bounds in HBM and the
        # OOB tail of the VMEM tile is undefined.  `rem` is a static Python
        # int (multiple of 128), so a static ref slice skips the undefined
        # tail with zero runtime masking cost.
        @pl.when(k < nk - 1)
        def _():
            x_tile = x_ref[...].astype(jnp.bfloat16)
            acc_ref[...] += jnp.dot(x_tile, we_ref[...],
                                    preferred_element_type=jnp.float32)

        @pl.when(k == nk - 1)
        def _():
            x_tile = x_ref[:, :rem].astype(jnp.bfloat16)
            acc_ref[...] += jnp.dot(x_tile, we_ref[:rem, :],
                                    preferred_element_type=jnp.float32)

    @pl.when(k == nk - 1)
    def _():
        h1 = jnp.clip(acc_ref[...] + be_ref[...], 0.0, 1.0)               # clamp1
        h2 = jnp.dot(h1, w1_ref[...], preferred_element_type=jnp.float32)
        h2 = jnp.clip(h2 + b1_ref[...], 0.0, 1.0)                         # clamp2
        h3 = jnp.dot(h2, w2_ref[...], preferred_element_type=jnp.float32)
        h3 = jnp.clip(h3 + b2_ref[...], 0.0, 1.0)                         # clamp3
        h4 = jnp.dot(h3, w3_ref[...], preferred_element_type=jnp.float32)
        out_ref[...] = (h4 + b3_ref[...]).astype(out_ref.dtype)


# ----------------------------------------------------------------------------
# Wrapper
# ----------------------------------------------------------------------------
def _generation_defaults():
    """Return (default K tile, scoped VMEM limit) for the local TPU generation.

    v5e/v6e: 128 MiB physical VMEM -> tk=65536 (16 MiB bf16 weight tile,
             32 MiB double-buffered) under a 48 MiB scoped limit.
    v7x:      64 MiB physical VMEM -> tk=32768 (8 MiB tile, 16 MiB
             double-buffered) under a 32 MiB scoped limit.
    """
    vmem_cap = None
    try:
        info = pltpu.get_tpu_info()
        vmem_cap = getattr(info, "vmem_capacity_bytes", None)
    except Exception:
        vmem_cap = None
    if vmem_cap is not None and vmem_cap >= 100 * 1024 * 1024:
        return 65536, 48 * 1024 * 1024
    return 32768, 32 * 1024 * 1024


def prepare_params(raw_params):
    """ONE-TIME (model-load) weight preprocessing.  Never call per forward.

    Casts the encode weight to bf16 (the HBM-bound stream) and zero-pads its K
    dimension to a fixed multiple of 128, independent of the runtime tile size
    (the kernel's cdiv grid handles any tk).  Padded rows contribute exactly 0.
    """
    we, be, w1, b1, w2, b2, w3, b3 = raw_params
    K = we.shape[0]
    Kp = _round_up(K, 128)
    we = we.astype(jnp.bfloat16)
    if Kp != K:
        we = jnp.pad(we, ((0, Kp - K), (0, 0)))
    f32 = lambda a: a.astype(jnp.float32)
    return (we, f32(be), f32(w1), f32(b1), f32(w2), f32(b2), f32(w3), f32(b3))


def nnue_forward(d, prepared_params, *, tk=None):
    """NNUE forward.

    d: [B, K] board features (bool / int8) -- passed through untouched (no f32
       materialization); the kernel casts per-tile.
    prepared_params: output of prepare_params() (we is bf16, K padded to 128).
    tk: K-tile size (rounded to a multiple of 128). Default is per-generation.
    """
    we, be, w1, b1, w2, b2, w3, b3 = prepared_params
    Kp = we.shape[0]
    assert Kp % 128 == 0 and we.dtype == jnp.bfloat16, \
        "run params through prepare_params() once at model-load time"

    if d.dtype == jnp.bool_:
        d = d.astype(jnp.int8)            # keep features at 1 byte in HBM
    B, K = d.shape
    assert K <= Kp
    if K != Kp:
        # Cheap (<=127 int8 columns per row).  For very large B*K, pre-pad the
        # feature encoding once outside the forward as well.
        d = jnp.pad(d, ((0, 0), (0, Kp - K)))

    tk_default, vmem_limit = _generation_defaults()
    if tk is None:
        tk = tk_default
    tk = max(128, _round_up(int(tk), 128))
    tk = min(tk, Kp)
    # Shrink tk if the double-buffered weight + feature tiles would not fit the
    # scoped VMEM limit (only matters for very large B).
    while tk > 128:
        need = 2 * (tk * H1 * 2) + 2 * (B * tk) + (2 << 20)
        if need <= vmem_limit:
            break
        tk = max(128, (tk // 2) // 128 * 128)

    nk = pl.cdiv(Kp, tk)
    rem = Kp - (nk - 1) * tk              # static Python int, multiple of 128

    grid_spec = pltpu.PrefetchScalarGridSpec(
        num_scalar_prefetch=0,
        grid=(nk,),
        in_specs=[
            pl.BlockSpec((B, tk), lambda k: (0, k)),        # x tile (int8)
            pl.BlockSpec((tk, H1), lambda k: (k, 0)),       # encode weight (bf16)
            pl.BlockSpec((1, H1), lambda k: (0, 0)),        # encode bias
            pl.BlockSpec((H1, H2), lambda k: (0, 0)),       # linear1 weight
            pl.BlockSpec((1, H2), lambda k: (0, 0)),        # linear1 bias
            pl.BlockSpec((H2, H3), lambda k: (0, 0)),       # linear2 weight
            pl.BlockSpec((1, H3), lambda k: (0, 0)),        # linear2 bias
            pl.BlockSpec((H3, H4), lambda k: (0, 0)),       # linear3 weight
            pl.BlockSpec((1, H4), lambda k: (0, 0)),        # linear3 bias
        ],
        out_specs=pl.BlockSpec((B, H4), lambda k: (0, 0)),
        scratch_shapes=[pltpu.VMEM((B, H1), jnp.float32)],  # encode accumulator
    )

    return pl.pallas_call(
        functools.partial(nnue_kernel, rem=rem),
        out_shape=jax.ShapeDtypeStruct((B, H4), jnp.float32),
        grid_spec=grid_spec,
        compiler_params=pltpu.CompilerParams(
            dimension_semantics=("arbitrary",),   # K is a reduction axis
            vmem_limit_bytes=vmem_limit,
        ),
    )(d, we, be, w1, b1, w2, b2, w3, b3)


# ----------------------------------------------------------------------------
# Params / reference / self-test
# ----------------------------------------------------------------------------
def init_params(key, encode_len):
    """Raw (f32, PyTorch-equivalent) parameters, weights stored as [in, out]."""
    ks = jax.random.split(key, 8)

    def lin(kw, kb, fan_in, fan_out):
        bound = 1.0 / jnp.sqrt(fan_in)
        w = jax.random.uniform(kw, (fan_in, fan_out), jnp.float32, -bound, bound)
        b = jax.random.uniform(kb, (1, fan_out), jnp.float32, -bound, bound)
        return w, b

    we, be = lin(ks[0], ks[1], encode_len, H1)
    w1, b1 = lin(ks[2], ks[3], H1, H2)
    w2, b2 = lin(ks[4], ks[5], H2, H3)
    w3, b3 = lin(ks[6], ks[7], H3, H4)
    return (we, be, w1, b1, w2, b2, w3, b3)


def nnue_reference(d, prepared_params):
    we, be, w1, b1, w2, b2, w3, b3 = prepared_params
    K = d.shape[1]
    x = d.astype(jnp.float32)
    h1 = jnp.clip(x @ we[:K].astype(jnp.float32) + be, 0.0, 1.0)
    h2 = jnp.clip(h1 @ w1 + b1, 0.0, 1.0)
    h3 = jnp.clip(h2 @ w2 + b2, 0.0, 1.0)
    return h3 @ w3 + b3


if __name__ == "__main__":
    key = jax.random.PRNGKey(0)
    k_param, k_in = jax.random.split(key)

    # Small synthetic size (real model has ENCODE_LEN_FULL = 1,253,446).  K is
    # deliberately not a multiple of 128 so the load-time 128-pad is exercised.
    B, K_test = 8, 3000
    raw_params = init_params(k_param, K_test)
    params = prepare_params(raw_params)    # one-time, model-load preprocessing

    # sparse binary board-feature encoding, kept as int8 (cast happens in-kernel)
    d = jax.random.bernoulli(k_in, p=0.05, shape=(B, K_test)).astype(jnp.int8)

    # tk=1280 does NOT divide Kp=3072 -> exercises the cdiv / static-slice
    # partial-last-tile path needed for the real, non-aligned ENCODE_LEN.
    out_uneven = jax.block_until_ready(nnue_forward(d, params, tk=1280))
    # tk=1024 divides Kp=3072 -> exercises the aligned multi-step path.
    out_even = jax.block_until_ready(nnue_forward(d, params, tk=1024))

    ref = nnue_reference(d, params)
    assert out_uneven.shape == (B, 1)
    assert jnp.allclose(out_uneven, ref, atol=5e-4, rtol=5e-3), (out_uneven, ref)
    assert jnp.allclose(out_even, ref, atol=5e-4, rtol=5e-3), (out_even, ref)
    print("KERNEL_OK")
</pallas_src>

<mosaic_0001>
module attributes {stable_mosaic.version = 11 : i64} {
  func.func @nnue_kernel(%arg0: i32, %arg1: memref<8x1280xi8, #tpu.memory_space<vmem>>, %arg2: memref<1280x128xbf16, #tpu.memory_space<vmem>>, %arg3: memref<1x128xf32, #tpu.memory_space<vmem>>, %arg4: memref<128x64xf32, #tpu.memory_space<vmem>>, %arg5: memref<1x64xf32, #tpu.memory_space<vmem>>, %arg6: memref<64x32xf32, #tpu.memory_space<vmem>>, %arg7: memref<1x32xf32, #tpu.memory_space<vmem>>, %arg8: memref<32x1xf32, #tpu.memory_space<vmem>>, %arg9: memref<1x1xf32, #tpu.memory_space<vmem>>, %arg10: memref<8x1xf32, #tpu.memory_space<vmem>>, %arg11: memref<8x128xf32, #tpu.memory_space<vmem>>) attributes {dimension_semantics = [#tpu.dimension_semantics<arbitrary>], iteration_bounds = array<i64: 3>, scalar_prefetch = 0 : i64, scratch_operands = 1 : i64, tpu.core_type = #tpu.core_type<tc>, window_params = [{transform_indices = @transform_0, window_bounds = array<i64: 8, 1280>}, {transform_indices = @transform_1, window_bounds = array<i64: 1280, 128>}, {pipeline_mode = #tpu.pipeline_mode<synchronous>, transform_indices = @transform_2, window_bounds = array<i64: 1, 128>}, {pipeline_mode = #tpu.pipeline_mode<synchronous>, transform_indices = @transform_3, window_bounds = array<i64: 128, 64>}, {pipeline_mode = #tpu.pipeline_mode<synchronous>, transform_indices = @transform_4, window_bounds = array<i64: 1, 64>}, {pipeline_mode = #tpu.pipeline_mode<synchronous>, transform_indices = @transform_5, window_bounds = array<i64: 64, 32>}, {pipeline_mode = #tpu.pipeline_mode<synchronous>, transform_indices = @transform_6, window_bounds = array<i64: 1, 32>}, {pipeline_mode = #tpu.pipeline_mode<synchronous>, transform_indices = @transform_7, window_bounds = array<i64: 32, 1>}, {pipeline_mode = #tpu.pipeline_mode<synchronous>, transform_indices = @transform_8, window_bounds = array<i64: 1, 1>}, {pipeline_mode = #tpu.pipeline_mode<synchronous>, transform_indices = @transform_9, window_bounds = array<i64: 8, 1>}]} {
    %c0_i32 = arith.constant 0 : i32
    %0 = arith.cmpi eq, %arg0, %c0_i32 : i32
    %1 = arith.extui %0 : i1 to i32
    %c0_i32_0 = arith.constant 0 : i32
    %2 = arith.cmpi ne, %1, %c0_i32_0 : i32
    scf.if %2 {
      %cst = arith.constant 0.000000e+00 : f32
      %12 = vector.broadcast %cst : f32 to vector<8x128xf32>
      %c0 = arith.constant 0 : index
      %c0_6 = arith.constant 0 : index
      %13 = vector.load %arg11[%c0, %c0_6] : memref<8x128xf32, #tpu.memory_space<vmem>>, vector<8x128xf32>
      tpu.vector_store %arg11[%c0, %c0_6], %12 {strides = array<i32>} : memref<8x128xf32, #tpu.memory_space<vmem>>, vector<8x128xf32>,
    } else {
    }
    %c2_i32 = arith.constant 2 : i32
    %3 = arith.cmpi slt, %arg0, %c2_i32 : i32
    %4 = arith.extui %3 : i1 to i32
    %c0_i32_1 = arith.constant 0 : i32
    %5 = arith.cmpi ne, %4, %c0_i32_1 : i32
    scf.if %5 {
      %c0 = arith.constant 0 : index
      %c0_6 = arith.constant 0 : index
      %12 = vector.load %arg1[%c0, %c0_6] : memref<8x1280xi8, #tpu.memory_space<vmem>>, vector<8x1280xi8>
      %13 = arith.sitofp %12 : vector<8x1280xi8> to vector<8x1280xbf16>
      %c0_7 = arith.constant 0 : index
      %c0_8 = arith.constant 0 : index
      %14 = vector.load %arg11[%c0_7, %c0_8] : memref<8x128xf32, #tpu.memory_space<vmem>>, vector<8x128xf32>
      %c0_9 = arith.constant 0 : index
      %c0_10 = arith.constant 0 : index
      %15 = vector.load %arg2[%c0_9, %c0_10] : memref<1280x128xbf16, #tpu.memory_space<vmem>>, vector<1280x128xbf16>
      %cst = arith.constant dense<0.000000e+00> : vector<8x128xf32>
      %16 = tpu.matmul %13, %15, %cst {dimension_numbers = #tpu.dot_dimension_numbers<[1], [0], [0], [1], [0, 0, 1, 1], [], []>} : vector<8x1280xbf16>, vector<1280x128xbf16>, vector<8x128xf32> -> vector<8x128xf32>
      %17 = arith.addf %14, %16 : vector<8x128xf32>
      %c0_11 = arith.constant 0 : index
      %c0_12 = arith.constant 0 : index
      %18 = vector.load %arg11[%c0_11, %c0_12] : memref<8x128xf32, #tpu.memory_space<vmem>>, vector<8x128xf32>
      tpu.vector_store %arg11[%c0_11, %c0_12], %17 {strides = array<i32>} : memref<8x128xf32, #tpu.memory_space<vmem>>, vector<8x128xf32>,
    } else {
    }
    %c2_i32_2 = arith.constant 2 : i32
    %6 = arith.cmpi eq, %arg0, %c2_i32_2 : i32
    %7 = arith.extui %6 : i1 to i32
    %c0_i32_3 = arith.constant 0 : i32
    %8 = arith.cmpi ne, %7, %c0_i32_3 : i32
    scf.if %8 {
      %c0 = arith.constant 0 : index
      %c0_6 = arith.constant 0 : index
      %12 = vector.load %arg1[%c0, %c0_6] : memref<8x1280xi8, #tpu.memory_space<vmem>>, vector<8x512xi8>
      %13 = arith.sitofp %12 : vector<8x512xi8> to vector<8x512xbf16>
      %c0_7 = arith.constant 0 : index
      %c0_8 = arith.constant 0 : index
      %14 = vector.load %arg11[%c0_7, %c0_8] : memref<8x128xf32, #tpu.memory_space<vmem>>, vector<8x128xf32>
      %c0_9 = arith.constant 0 : index
      %c0_10 = arith.constant 0 : index
      %15 = vector.load %arg2[%c0_9, %c0_10] : memref<1280x128xbf16, #tpu.memory_space<vmem>>, vector<512x128xbf16>
      %cst = arith.constant dense<0.000000e+00> : vector<8x128xf32>
      %16 = tpu.matmul %13, %15, %cst {dimension_numbers = #tpu.dot_dimension_numbers<[1], [0], [0], [1], [0, 0, 1, 1], [], []>} : vector<8x512xbf16>, vector<512x128xbf16>, vector<8x128xf32> -> vector<8x128xf32>
      %17 = arith.addf %14, %16 : vector<8x128xf32>
      %c0_11 = arith.constant 0 : index
      %c0_12 = arith.constant 0 : index
      %18 = vector.load %arg11[%c0_11, %c0_12] : memref<8x128xf32, #tpu.memory_space<vmem>>, vector<8x128xf32>
      tpu.vector_store %arg11[%c0_11, %c0_12], %17 {strides = array<i32>} : memref<8x128xf32, #tpu.memory_space<vmem>>, vector<8x128xf32>,
    } else {
    }
    %c2_i32_4 = arith.constant 2 : i32
    %9 = arith.cmpi eq, %arg0, %c2_i32_4 : i32
    %10 = arith.extui %9 : i1 to i32
    %c0_i32_5 = arith.constant 0 : i32
    %11 = arith.cmpi ne, %10, %c0_i32_5 : i32
    scf.if %11 {
      %c0 = arith.constant 0 : index
      %c0_6 = arith.constant 0 : index
      %12 = vector.load %arg11[%c0, %c0_6] : memref<8x128xf32, #tpu.memory_space<vmem>>, vector<8x128xf32>
      %c0_7 = arith.constant 0 : index
      %c0_8 = arith.constant 0 : index
      %13 = vector.load %arg3[%c0_7, %c0_8] : memref<1x128xf32, #tpu.memory_space<vmem>>, vector<1x128xf32>
      %14 = vector.broadcast %13 : vector<1x128xf32> to vector<8x128xf32>
      %15 = arith.addf %12, %14 : vector<8x128xf32>
      %cst = arith.constant 0.000000e+00 : f32
      %cst_9 = arith.constant 1.000000e+00 : f32
      %16 = vector.broadcast %cst : f32 to vector<8x128xf32>
      %17 = arith.maximumf %16, %15 : vector<8x128xf32>
      %18 = vector.broadcast %cst_9 : f32 to vector<8x128xf32>
      %19 = arith.minimumf %18, %17 : vector<8x128xf32>
      %c0_10 = arith.constant 0 : index
      %c0_11 = arith.constant 0 : index
      %20 = vector.load %arg4[%c0_10, %c0_11] : memref<128x64xf32, #tpu.memory_space<vmem>>, vector<128x64xf32>
      %cst_12 = arith.constant dense<0.000000e+00> : vector<8x64xf32>
      %21 = tpu.matmul %19, %20, %cst_12 {dimension_numbers = #tpu.dot_dimension_numbers<[1], [0], [0], [1], [0, 0, 1, 1], [], []>} : vector<8x128xf32>, vector<128x64xf32>, vector<8x64xf32> -> vector<8x64xf32>
      %c0_13 = arith.constant 0 : index
      %c0_14 = arith.constant 0 : index
      %22 = vector.load %arg5[%c0_13, %c0_14] : memref<1x64xf32, #tpu.memory_space<vmem>>, vector<1x64xf32>
      %23 = vector.broadcast %22 : vector<1x64xf32> to vector<8x64xf32>
      %24 = arith.addf %21, %23 : vector<8x64xf32>
      %cst_15 = arith.constant 0.000000e+00 : f32
      %cst_16 = arith.constant 1.000000e+00 : f32
      %25 = vector.broadcast %cst_15 : f32 to vector<8x64xf32>
      %26 = arith.maximumf %25, %24 : vector<8x64xf32>
      %27 = vector.broadcast %cst_16 : f32 to vector<8x64xf32>
      %28 = arith.minimumf %27, %26 : vector<8x64xf32>
      %c0_17 = arith.constant 0 : index
      %c0_18 = arith.constant 0 : index
      %29 = vector.load %arg6[%c0_17, %c0_18] : memref<64x32xf32, #tpu.memory_space<vmem>>, vector<64x32xf32>
      %cst_19 = arith.constant dense<0.000000e+00> : vector<8x32xf32>
      %30 = tpu.matmul %28, %29, %cst_19 {dimension_numbers = #tpu.dot_dimension_numbers<[1], [0], [0], [1], [0, 0, 1, 1], [], []>} : vector<8x64xf32>, vector<64x32xf32>, vector<8x32xf32> -> vector<8x32xf32>
      %c0_20 = arith.constant 0 : index
      %c0_21 = arith.constant 0 : index
      %31 = vector.load %arg7[%c0_20, %c0_21] : memref<1x32xf32, #tpu.memory_space<vmem>>, vector<1x32xf32>
      %32 = vector.broadcast %31 : vector<1x32xf32> to vector<8x32xf32>
      %33 = arith.addf %30, %32 : vector<8x32xf32>
      %cst_22 = arith.constant 0.000000e+00 : f32
      %cst_23 = arith.constant 1.000000e+00 : f32
      %34 = vector.broadcast %cst_22 : f32 to vector<8x32xf32>
      %35 = arith.maximumf %34, %33 : vector<8x32xf32>
      %36 = vector.broadcast %cst_23 : f32 to vector<8x32xf32>
      %37 = arith.minimumf %36, %35 : vector<8x32xf32>
      %c0_24 = arith.constant 0 : index
      %c0_25 = arith.constant 0 : index
      %38 = vector.load %arg8[%c0_24, %c0_25] : memref<32x1xf32, #tpu.memory_space<vmem>>, vector<32x1xf32>
      %cst_26 = arith.constant dense<0.000000e+00> : vector<8x1xf32>
      %39 = tpu.matmul %37, %38, %cst_26 {dimension_numbers = #tpu.dot_dimension_numbers<[1], [0], [0], [1], [0, 0, 1, 1], [], []>} : vector<8x32xf32>, vector<32x1xf32>, vector<8x1xf32> -> vector<8x1xf32>
      %c0_27 = arith.constant 0 : index
      %c0_28 = arith.constant 0 : index
      %40 = vector.load %arg9[%c0_27, %c0_28] : memref<1x1xf32, #tpu.memory_space<vmem>>, vector<1x1xf32>
      %41 = vector.broadcast %40 : vector<1x1xf32> to vector<8x1xf32>
      %42 = arith.addf %39, %41 : vector<8x1xf32>
      %c0_29 = arith.constant 0 : index
      %c0_30 = arith.constant 0 : index
      %43 = vector.load %arg10[%c0_29, %c0_30] : memref<8x1xf32, #tpu.memory_space<vmem>>, vector<8x1xf32>
      tpu.vector_store %arg10[%c0_29, %c0_30], %42 {strides = array<i32>} : memref<8x1xf32, #tpu.memory_space<vmem>>, vector<8x1xf32>,
    } else {
    }
    return
  }
  func.func @transform_0(%arg0: i32) -> (i32, i32) {
    %c0_i32 = arith.constant 0 : i32
    %c0_i32_0 = arith.constant 0 : i32
    return %c0_i32, %arg0 : i32, i32
  }
  func.func @transform_1(%arg0: i32) -> (i32, i32) {
    %c0_i32 = arith.constant 0 : i32
    %c0_i32_0 = arith.constant 0 : i32
    return %arg0, %c0_i32 : i32, i32
  }
  func.func @transform_2(%arg0: i32) -> (i32, i32) {
    %c0_i32 = arith.constant 0 : i32
    %c0_i32_0 = arith.constant 0 : i32
    %c0_i32_1 = arith.constant 0 : i32
    return %c0_i32, %c0_i32_0 : i32, i32
  }
  func.func @transform_3(%arg0: i32) -> (i32, i32) {
    %c0_i32 = arith.constant 0 : i32
    %c0_i32_0 = arith.constant 0 : i32
    %c0_i32_1 = arith.constant 0 : i32
    return %c0_i32, %c0_i32_0 : i32, i32
  }
  func.func @transform_4(%arg0: i32) -> (i32, i32) {
    %c0_i32 = arith.constant 0 : i32
    %c0_i32_0 = arith.constant 0 : i32
    %c0_i32_1 = arith.constant 0 : i32
    return %c0_i32, %c0_i32_0 : i32, i32
  }
  func.func @transform_5(%arg0: i32) -> (i32, i32) {
    %c0_i32 = arith.constant 0 : i32
    %c0_i32_0 = arith.constant 0 : i32
    %c0_i32_1 = arith.constant 0 : i32
    return %c0_i32, %c0_i32_0 : i32, i32
  }
  func.func @transform_6(%arg0: i32) -> (i32, i32) {
    %c0_i32 = arith.constant 0 : i32
    %c0_i32_0 = arith.constant 0 : i32
    %c0_i32_1 = arith.constant 0 : i32
    return %c0_i32, %c0_i32_0 : i32, i32
  }
  func.func @transform_7(%arg0: i32) -> (i32, i32) {
    %c0_i32 = arith.constant 0 : i32
    %c0_i32_0 = arith.constant 0 : i32
    %c0_i32_1 = arith.constant 0 : i32
    return %c0_i32, %c0_i32_0 : i32, i32
  }
  func.func @transform_8(%arg0: i32) -> (i32, i32) {
    %c0_i32 = arith.constant 0 : i32
    %c0_i32_0 = arith.constant 0 : i32
    %c0_i32_1 = arith.constant 0 : i32
    return %c0_i32, %c0_i32_0 : i32, i32
  }
  func.func @transform_9(%arg0: i32) -> (i32, i32) {
    %c0_i32 = arith.constant 0 : i32
    %c0_i32_0 = arith.constant 0 : i32
    %c0_i32_1 = arith.constant 0 : i32
    return %c0_i32, %c0_i32_0 : i32, i32
  }
}

</mosaic_0001>

<llo_original>
// kernel: tpu_custom_call.1
$region0: #{tpu_custom_call.1}
  #allocation0 [shape = 'u32[]', space=smem, size = 0x4, offset = 0x4, fixed_abs, tag = 'smem constant byte address 0x4 - core index']
  #allocation1 [shape = 'u32[144,128]{1,0:T(1,128)}', space=vmem, size = 0x12000, scoped, tag = 'internal scratch']
  #allocation2 [shape = 'f32[8,128]{1,0:T(8,128)}', space=vmem, size = 0x1000, scoped, tag = 'scratch operand']
  #allocation3 [shape = 'f32[1,1]{1,0:T(1,128)S(1)}', space=vmem, size = 0x200, scoped, tag = 'scoped memory for tpu_custom_call.1']
  %s0 = inlined_call_operand.vmem [shape: s8[8,3072], index: 0, kind: input, shape index: {}]
  %s1 = inlined_call_operand.hbm [shape: bf16[3072,128], index: 1, kind: input, shape index: {}]
  %s2 = inlined_call_operand.vmem [shape: f32[1,128], index: 2, kind: input, shape index: {}]
  %s3 = inlined_call_operand.vmem [shape: f32[128,64], index: 3, kind: input, shape index: {}]
  %s4 = inlined_call_operand.vmem [shape: f32[1,64], index: 4, kind: input, shape index: {}]
  %s5 = inlined_call_operand.vmem [shape: f32[64,32], index: 5, kind: input, shape index: {}]
  %s6 = inlined_call_operand.vmem [shape: f32[1,32], index: 6, kind: input, shape index: {}]
  %s7 = inlined_call_operand.vmem [shape: f32[32,1], index: 7, kind: input, shape index: {}]
  %s8 = inlined_call_operand.<no memory space> [shape: f32[1,1], index: 8, kind: input, shape index: {}]
  %s9 = inlined_call_operand.vmem [shape: f32[8,1], index: 9, kind: output, shape index: {}]
  %s10 = sld [smem:[#allocation0]]
  $region85: #{tpu_custom_call.1} parent=0
    _
  %s12 = ssub.s32 1, %s10
  %s13 = scalar_select 0, %s12, %s10
  %v14 = vstv %s8
  %15 = vst [vmem:[#allocation3] sm:$0x1] %v14
  $region1: #{tpu_custom_call.1} parent=0
    #allocation4 [shape = 'u8[655360]{0}', space=vmem, size = 0xa0000, scoped, tag = 'input window, operand 1']
    #allocation5 [shape = 's32[2]{0}', space=sflag, size = 0x8, scoped, tag = 'scoped memory for tpu_custom_call.1']
    %16 = vsyncpa [#allocation5], 0
    %s17 = scalar_lea.sflag [#allocation5], 1
    %18 = vsyncpa %s17, 0
    loop: start=0, step=1, limit=5
    $region2: #{tpu_custom_call.1} parent=1 // loop_pre_header
      _
    $region3: #{tpu_custom_call.1} parent=1 // loop_header
      %s20 = sphi 0, %s24
      %p21 = scmp.ge.s32.totalorder %s20, 5
      %s30 = sphi 0, %s32
      %s33 = sphi 0, %s30
      %s34 = sphi 0, %s33
      %s50 = sphi 0, %s34
      %s56 = sphi 0, %s58
      %s59 = sphi 0, %s56
      %s60 = sphi 0, %s59
      %s76 = sphi 0, %s60
      %s80 = sphi 0, %s80
      %s82 = sphi 0, %s80
      %s83 = sphi 0, %s82
      %s97 = sphi 0, %s83
      %s101 = sphi 0, %s101
      %s103 = sphi 0, %s101
      %s104 = sphi 0, %s103
      %s118 = sphi 0, %s104
      %s122 = sphi 0, %s122
      %s124 = sphi 0, %s122
      %s125 = sphi 0, %s124
      %s139 = sphi 0, %s125
      %s143 = sphi 0, %s143
      %s145 = sphi 0, %s143
      %s146 = sphi 0, %s145
      %s160 = sphi 0, %s146
      %s164 = sphi 0, %s164
      %s166 = sphi 0, %s164
      %s167 = sphi 0, %s166
      %s181 = sphi 0, %s167
      %s185 = sphi 0, %s185
      %s187 = sphi 0, %s185
      %s188 = sphi 0, %s187
      %s202 = sphi 0, %s188
      %s206 = sphi 0, %s206
      %s208 = sphi 0, %s206
      %s209 = sphi 0, %s208
      %s223 = sphi 0, %s209
      %s227 = sphi 0, %s227
      %s229 = sphi 0, %s227
      %s230 = sphi 0, %s229
      %s244 = sphi 0, %s230
    $region4: #{tpu_custom_call.1} parent=1 // loop_header_branch
      %23 = sbr.rel (%p21) target = $region8
    $region5: #{tpu_custom_call.1} parent=1 // loop_body
      %s25 = ssub.s32 %s20, 1
      %s26 = ssub.s32 %s20, 2
      %s27 = sadd.s32 %s20, 1
      %s28 = ssub.s32 %s20, %s27
      %p29 = scmp.eq.s32.totalorder %s28, 0
      %s31 = sadd.s32 %s30, 1
      %s32 = scalar_select %p29, %s30, %s31
      %p35 = pneg %p29
      %p36 = scmp.eq.s32.totalorder %s20, 2
      %p37 = por %p35, %p36
      %p38 = scmp.ne.s32.totalorder %s30, %s33
      %p39 = scmp.eq.s32.totalorder %s20, 0
      %p40 = por %p38, %p39
      %p41 = scmp.ne.s32.totalorder %s30, %s33
      %p42 = scmp.eq.s32.totalorder %s25, 2
      %p43 = por %p41, %p42
      %p44 = scmp.ne.s32.totalorder %s33, %s34
      %p45 = scmp.eq.s32.totalorder %s25, 0
      %p46 = por %p44, %p45
      %p47 = scmp.ne.s32.totalorder %s33, %s34
      %p48 = scmp.eq.s32.totalorder %s26, 2
      %p49 = por %p47, %p48
      %p51 = scmp.ne.s32.totalorder %s34, %s50
      %p52 = scmp.eq.s32.totalorder %s26, 0
      %p53 = por %p51, %p52
      %s54 = ssub.s32 %s20, %s27
      %p55 = scmp.eq.s32.totalorder %s54, 0
      %s57 = sadd.s32 %s56, 1
      %s58 = scalar_select %p55, %s56, %s57
      %p61 = pneg %p55
      %p62 = scmp.eq.s32.totalorder %s20, 2
      %p63 = por %p61, %p62
      %p64 = scmp.ne.s32.totalorder %s56, %s59
      %p65 = scmp.eq.s32.totalorder %s20, 0
      %p66 = por %p64, %p65
      %p67 = scmp.ne.s32.totalorder %s56, %s59
      %p68 = scmp.eq.s32.totalorder %s25, 2
      %p69 = por %p67, %p68
      %p70 = scmp.ne.s32.totalorder %s59, %s60
      %p71 = scmp.eq.s32.totalorder %s25, 0
      %p72 = por %p70, %p71
      %p73 = scmp.ne.s32.totalorder %s59, %s60
      %p74 = scmp.eq.s32.totalorder %s26, 2
      %p75 = por %p73, %p74
      %p77 = scmp.ne.s32.totalorder %s60, %s76
      %p78 = scmp.eq.s32.totalorder %s26, 0
      %p79 = por %p77, %p78
      %s81 = sadd.s32 %s80, 1
      %p84 = scmp.eq.s32.totalorder %s20, 2
      %p85 = scmp.ne.s32.totalorder %s80, %s82
      %p86 = scmp.eq.s32.totalorder %s20, 0
      %p87 = por %p85, %p86
      %p88 = scmp.ne.s32.totalorder %s80, %s82
      %p89 = scmp.eq.s32.totalorder %s25, 2
      %p90 = por %p88, %p89
      %p91 = scmp.ne.s32.totalorder %s82, %s83
      %p92 = scmp.eq.s32.totalorder %s25, 0
      %p93 = por %p91, %p92
      %p94 = scmp.ne.s32.totalorder %s82, %s83
      %p95 = scmp.eq.s32.totalorder %s26, 2
      %p96 = por %p94, %p95
      %p98 = scmp.ne.s32.totalorder %s83, %s97
      %p99 = scmp.eq.s32.totalorder %s26, 0
      %p100 = por %p98, %p99
      %s102 = sadd.s32 %s101, 1
      %p105 = scmp.eq.s32.totalorder %s20, 2
      %p106 = scmp.ne.s32.totalorder %s101, %s103
      %p107 = scmp.eq.s32.totalorder %s20, 0
      %p108 = por %p106, %p107
      %p109 = scmp.ne.s32.totalorder %s101, %s103
      %p110 = scmp.eq.s32.totalorder %s25, 2
      %p111 = por %p109, %p110
      %p112 = scmp.ne.s32.totalorder %s103, %s104
      %p113 = scmp.eq.s32.totalorder %s25, 0
      %p114 = por %p112, %p113
      %p115 = scmp.ne.s32.totalorder %s103, %s104
      %p116 = scmp.eq.s32.totalorder %s26, 2
      %p117 = por %p115, %p116
      %p119 = scmp.ne.s32.totalorder %s104, %s118
      %p120 = scmp.eq.s32.totalorder %s26, 0
      %p121 = por %p119, %p120
      %s123 = sadd.s32 %s122, 1
      %p126 = scmp.eq.s32.totalorder %s20, 2
      %p127 = scmp.ne.s32.totalorder %s122, %s124
      %p128 = scmp.eq.s32.totalorder %s20, 0
      %p129 = por %p127, %p128
      %p130 = scmp.ne.s32.totalorder %s122, %s124
      %p131 = scmp.eq.s32.totalorder %s25, 2
      %p132 = por %p130, %p131
      %p133 = scmp.ne.s32.totalorder %s124, %s125
      %p134 = scmp.eq.s32.totalorder %s25, 0
      %p135 = por %p133, %p134
      %p136 = scmp.ne.s32.totalorder %s124, %s125
      %p137 = scmp.eq.s32.totalorder %s26, 2
      %p138 = por %p136, %p137
      %p140 = scmp.ne.s32.totalorder %s125, %s139
      %p141 = scmp.eq.s32.totalorder %s26, 0
      %p142 = por %p140, %p141
      %s144 = sadd.s32 %s143, 1
      %p147 = scmp.eq.s32.totalorder %s20, 2
      %p148 = scmp.ne.s32.totalorder %s143, %s145
      %p149 = scmp.eq.s32.totalorder %s20, 0
      %p150 = por %p148, %p149
      %p151 = scmp.ne.s32.totalorder %s143, %s145
      %p152 = scmp.eq.s32.totalorder %s25, 2
      %p153 = por %p151, %p152
      %p154 = scmp.ne.s32.totalorder %s145, %s146
      %p155 = scmp.eq.s32.totalorder %s25, 0
      %p156 = por %p154, %p155
      %p157 = scmp.ne.s32.totalorder %s145, %s146
      %p158 = scmp.eq.s32.totalorder %s26, 2
      %p159 = por %p157, %p158
      %p161 = scmp.ne.s32.totalorder %s146, %s160
      %p162 = scmp.eq.s32.totalorder %s26, 0
      %p163 = por %p161, %p162
      %s165 = sadd.s32 %s164, 1
      %p168 = scmp.eq.s32.totalorder %s20, 2
      %p169 = scmp.ne.s32.totalorder %s164, %s166
      %p170 = scmp.eq.s32.totalorder %s20, 0
      %p171 = por %p169, %p170
      %p172 = scmp.ne.s32.totalorder %s164, %s166
      %p173 = scmp.eq.s32.totalorder %s25, 2
      %p174 = por %p172, %p173
      %p175 = scmp.ne.s32.totalorder %s166, %s167
      %p176 = scmp.eq.s32.totalorder %s25, 0
      %p177 = por %p175, %p176
      %p178 = scmp.ne.s32.totalorder %s166, %s167
      %p179 = scmp.eq.s32.totalorder %s26, 2
      %p180 = por %p178, %p179
      %p182 = scmp.ne.s32.totalorder %s167, %s181
      %p183 = scmp.eq.s32.totalorder %s26, 0
      %p184 = por %p182, %p183
      %s186 = sadd.s32 %s185, 1
      %p189 = scmp.eq.s32.totalorder %s20, 2
      %p190 = scmp.ne.s32.totalorder %s185, %s187
      %p191 = scmp.eq.s32.totalorder %s20, 0
      %p192 = por %p190, %p191
      %p193 = scmp.ne.s32.totalorder %s185, %s187
      %p194 = scmp.eq.s32.totalorder %s25, 2
      %p195 = por %p193, %p194
      %p196 = scmp.ne.s32.totalorder %s187, %s188
      %p197 = scmp.eq.s32.totalorder %s25, 0
      %p198 = por %p196, %p197
      %p199 = scmp.ne.s32.totalorder %s187, %s188
      %p200 = scmp.eq.s32.totalorder %s26, 2
      %p201 = por %p199, %p200
      %p203 = scmp.ne.s32.totalorder %s188, %s202
      %p204 = scmp.eq.s32.totalorder %s26, 0
      %p205 = por %p203, %p204
      %s207 = sadd.s32 %s206, 1
      %p210 = scmp.eq.s32.totalorder %s20, 2
      %p211 = scmp.ne.s32.totalorder %s206, %s208
      %p212 = scmp.eq.s32.totalorder %s20, 0
      %p213 = por %p211, %p212
      %p214 = scmp.ne.s32.totalorder %s206, %s208
      %p215 = scmp.eq.s32.totalorder %s25, 2
      %p216 = por %p214, %p215
      %p217 = scmp.ne.s32.totalorder %s208, %s209
      %p218 = scmp.eq.s32.totalorder %s25, 0
      %p219 = por %p217, %p218
      %p220 = scmp.ne.s32.totalorder %s208, %s209
      %p221 = scmp.eq.s32.totalorder %s26, 2
      %p222 = por %p220, %p221
      %p224 = scmp.ne.s32.totalorder %s209, %s223
      %p225 = scmp.eq.s32.totalorder %s26, 0
      %p226 = por %p224, %p225
      %s228 = sadd.s32 %s227, 1
      %p231 = scmp.eq.s32.totalorder %s20, 2
      %p232 = scmp.ne.s32.totalorder %s227, %s229
      %p233 = scmp.eq.s32.totalorder %s20, 0
      %p234 = por %p232, %p233
      %p235 = scmp.ne.s32.totalorder %s227, %s229
      %p236 = scmp.eq.s32.totalorder %s25, 2
      %p237 = por %p235, %p236
      %p238 = scmp.ne.s32.totalorder %s229, %s230
      %p239 = scmp.eq.s32.totalorder %s25, 0
      %p240 = por %p238, %p239
      %p241 = scmp.ne.s32.totalorder %s229, %s230
      %p242 = scmp.eq.s32.totalorder %s26, 2
      %p243 = por %p241, %p242
      %p245 = scmp.ne.s32.totalorder %s230, %s244
      %p246 = scmp.eq.s32.totalorder %s26, 0
      %p247 = por %p245, %p246
      %p248 = scmp.le.s32.totalorder 1, %s20
      %p249 = scmp.lt.s32.totalorder %s20, 4
      %p250 = pnand %p248, %p249
      %p251 = pneg %p250
      // Predicated region
      $region9: #{tpu_custom_call.1} parent=5 // pred_check
        _
      $region10: #{tpu_custom_call.1} parent=5 // pred_check_branch
        %253 = sbr.rel (%p250) target = $region12
      $region11: #{tpu_custom_call.1} parent=5 // pred_region
        %s254 = ssub.s32 %s20, 1
        // Predicated region
        $region13: #{tpu_custom_call.1} parent=11 // pred_check
          %p255 = pneg %p93
        $region14: #{tpu_custom_call.1} parent=11 // pred_check_branch
          %257 = sbr.rel (%p255) target = $region16
        $region15: #{tpu_custom_call.1} parent=11 // pred_region
          _
        $region16: #{tpu_custom_call.1} parent=11 // pred_fallthru
          _
        // Predicated region
        $region17: #{tpu_custom_call.1} parent=11 // pred_check
          %p258 = pneg %p114
        $region18: #{tpu_custom_call.1} parent=11 // pred_check_branch
          %260 = sbr.rel (%p258) target = $region20
        $region19: #{tpu_custom_call.1} parent=11 // pred_region
          _
        $region20: #{tpu_custom_call.1} parent=11 // pred_fallthru
          _
        // Predicated region
        $region21: #{tpu_custom_call.1} parent=11 // pred_check
          %p261 = pneg %p135
        $region22: #{tpu_custom_call.1} parent=11 // pred_check_branch
          %263 = sbr.rel (%p261) target = $region24
        $region23: #{tpu_custom_call.1} parent=11 // pred_region
          _
        $region24: #{tpu_custom_call.1} parent=11 // pred_fallthru
          _
        // Predicated region
        $region25: #{tpu_custom_call.1} parent=11 // pred_check
          %p264 = pneg %p156
        $region26: #{tpu_custom_call.1} parent=11 // pred_check_branch
          %266 = sbr.rel (%p264) target = $region28
        $region27: #{tpu_custom_call.1} parent=11 // pred_region
          _
        $region28: #{tpu_custom_call.1} parent=11 // pred_fallthru
          _
        // Predicated region
        $region29: #{tpu_custom_call.1} parent=11 // pred_check
          %p267 = pneg %p177
        $region30: #{tpu_custom_call.1} parent=11 // pred_check_branch
          %269 = sbr.rel (%p267) target = $region32
        $region31: #{tpu_custom_call.1} parent=11 // pred_region
          _
        $region32: #{tpu_custom_call.1} parent=11 // pred_fallthru
          _
        // Predicated region
        $region33: #{tpu_custom_call.1} parent=11 // pred_check
          %p270 = pneg %p198
        $region34: #{tpu_custom_call.1} parent=11 // pred_check_branch
          %272 = sbr.rel (%p270) target = $region36
        $region35: #{tpu_custom_call.1} parent=11 // pred_region
          _
        $region36: #{tpu_custom_call.1} parent=11 // pred_fallthru
          _
        // Predicated region
        $region37: #{tpu_custom_call.1} parent=11 // pred_check
          %p273 = pneg %p219
        $region38: #{tpu_custom_call.1} parent=11 // pred_check_branch
          %275 = sbr.rel (%p273) target = $region40
        $region39: #{tpu_custom_call.1} parent=11 // pred_region
          _
        $region40: #{tpu_custom_call.1} parent=11 // pred_fallthru
          _
      $region12: #{tpu_custom_call.1} parent=5 // pred_fallthru
        _
      %p276 = scmp.lt.s32.totalorder %s20, 3
      // Predicated region
      $region41: #{tpu_custom_call.1} parent=5 // pred_check
        %p277 = pneg %p276
      $region42: #{tpu_custom_call.1} parent=5 // pred_check_branch
        %279 = sbr.rel (%p277) target = $region44
      $region43: #{tpu_custom_call.1} parent=5 // pred_region
        // Predicated region
        $region45: #{tpu_custom_call.1} parent=43 // pred_check
          %p280 = pneg %p40
        $region46: #{tpu_custom_call.1} parent=43 // pred_check_branch
          %282 = sbr.rel (%p280) target = $region48
        $region47: #{tpu_custom_call.1} parent=43 // pred_region
          %s283 = smul.u32 10, %s20
          %s284 = ssub.s32 24, %s283
          %p285 = scmp.lt.s32.totalorder %s284, 10
          %s286 = scalar_select %p285, %s284, 10
          %s287 = smul.u32 32, %s286
          %p288 = scmp.lt.s32.totalorder %s283, 23
          %s289 = scalar_select %p288, %s283, 23
          %s290 = smul.addr %s289, 2
          %s291 = scalar_lea.vmem %s0, %s290
          %s292 = smul.u32 10, %s20
          %s293 = ssub.s32 24, %s292
          %p294 = scmp.lt.s32.totalorder %s293, 10
          %s295 = scalar_select %p294, %s293, 10
          %s296 = smul.u32 32, %s295
        $region48: #{tpu_custom_call.1} parent=43 // pred_fallthru
          _
        // Predicated region
        $region49: #{tpu_custom_call.1} parent=43 // pred_check
          %p297 = pneg %p66
        $region50: #{tpu_custom_call.1} parent=43 // pred_check_branch
          %299 = sbr.rel (%p297) target = $region52
        $region51: #{tpu_custom_call.1} parent=43 // pred_region
          %s300 = sand.u32 %s56, 1
          %s301 = scalar_lea.sflag [#allocation5], %s300
          %s302 = sand.u32 %s56, 1
          %s303 = smul.addr %s302, 640
          %s304 = scalar_lea.vmem [#allocation4], %s303
          %s305 = smul.u32 160, %s20
          %s306 = ssub.s32 384, %s305
          %p307 = scmp.lt.s32.totalorder %s306, 160
          %s308 = scalar_select %p307, %s306, 160
          %s309 = smul.u32 64, %s308
          %s311 = ssub.s32 10240, %s309
          %312 = vsyncadd %s301, %s311
          %p313 = scmp.ne.s32.totalorder 0, %s309
          %s314 = smul.addr %s305, 64
          %s315 = scalar_lea.hbm %s1, %s314
          %s316 = smul.u32 4, %s308
          %s317 = sshll.u32 %s304, 4
          %s318 = int_to_ptr.vmem [resolvable:$true] %s317
          %s319 = sshll.u32 %s316, 4
          %323 = dma.hbm_to_vmem [thread:$0]  (%p313), %s315, %s319, %s318, %s301, 64, 64, 4
        $region52: #{tpu_custom_call.1} parent=43 // pred_fallthru
          _
      $region44: #{tpu_custom_call.1} parent=5 // pred_fallthru
        _
      %p324 = scmp.le.s32.totalorder 1, %s20
      %p325 = scmp.lt.s32.totalorder %s20, 4
      %p326 = pnand %p324, %p325
      %p327 = pneg %p326
      // Predicated region
      $region53: #{tpu_custom_call.1} parent=5 // pred_check
        _
      $region54: #{tpu_custom_call.1} parent=5 // pred_check_branch
        %329 = sbr.rel (%p326) target = $region56
      $region55: #{tpu_custom_call.1} parent=5 // pred_region
        %s330 = ssub.s32 %s20, 1
        %s331 = sand.u32 %s59, 1
        %s332 = scalar_lea.sflag [#allocation5], %s331
        %s333 = sand.u32 %s59, 1
        %s334 = smul.addr %s333, 640
        %s335 = scalar_lea.vmem [#allocation4], %s334
        // Predicated region
        $region57: #{tpu_custom_call.1} parent=55 // pred_check
          %p336 = pneg %p72
        $region58: #{tpu_custom_call.1} parent=55 // pred_check_branch
          %338 = sbr.rel (%p336) target = $region60
        $region59: #{tpu_custom_call.1} parent=55 // pred_region
          %339 = dma.done %s332, 10240
        $region60: #{tpu_custom_call.1} parent=55 // pred_fallthru
          _
        %s340 = smul.u32 10, %s25
        %s341 = ssub.s32 24, %s340
        %p342 = scmp.lt.s32.totalorder %s341, 10
        %s343 = scalar_select %p342, %s341, 10
        %s344 = smul.u32 32, %s343
        %p345 = scmp.lt.s32.totalorder %s340, 23
        %s346 = scalar_select %p345, %s340, 23
        %s347 = smul.addr %s346, 2
        %s348 = scalar_lea.vmem %s0, %s347
        %p349 = pneg %p46
        %p350 = pneg %p43
        %s351 = sand.u32 %s59, 1
        %s352 = scalar_lea.sflag [#allocation5], %s351
        %s353 = sand.u32 %s59, 1
        %s354 = smul.addr %s353, 640
        %s355 = scalar_lea.vmem [#allocation4], %s354
        %p356 = pneg %p72
        %p357 = pneg %p69
        %p358 = pneg %p93
        %p359 = pneg %p90
        %p360 = pneg %p114
        %p361 = pneg %p111
        %p362 = pneg %p135
        %p363 = pneg %p132
        %p364 = pneg %p156
        %p365 = pneg %p153
        %p366 = pneg %p177
        %p367 = pneg %p174
        %p368 = pneg %p198
        %p369 = pneg %p195
        %p370 = pneg %p219
        %p371 = pneg %p216
        %p372 = pneg %p240
        %p373 = pneg %p237
        %s374 = smul.u32 10, %s25
        %s375 = ssub.s32 24, %s374
        %p376 = scmp.lt.s32.totalorder %s375, 10
        %s377 = scalar_select %p376, %s375, 10
        %s378 = smul.u32 32, %s377
        %p379 = scmp.lt.s32.totalorder %s374, 23
        %s380 = scalar_select %p379, %s374, 23
        %s381 = smul.addr %s380, 2
        %s382 = scalar_lea.vmem %s0, %s381
        %s383 = smul.u32 10, %s25
        %s384 = ssub.s32 24, %s383
        %p385 = scmp.lt.s32.totalorder %s384, 10
        %s386 = scalar_select %p385, %s384, 10
        %s387 = smul.u32 32, %s386
        %s388 = smul.u32 160, %s25
        %s389 = ssub.s32 384, %s388
        %p390 = scmp.lt.s32.totalorder %s389, 160
        %s391 = scalar_select %p390, %s389, 160
        %s392 = smul.u32 64, %s391
        %p394 = scmp.eq.s32.totalorder %s25, 0
        // Predicated region
        $region61: #{tpu_custom_call.1} parent=55 // pred_check
          %p395 = pneg %p394
        $region62: #{tpu_custom_call.1} parent=55 // pred_check_branch
          %397 = sbr.rel (%p395) target = $region64
        $region63: #{tpu_custom_call.1} parent=55 // pred_region
          %398 = vst [vmem:[#allocation2] sm:$0xff] 0.0
        $region64: #{tpu_custom_call.1} parent=55 // pred_fallthru
          _
        %p399 = scmp.lt.s32.totalorder %s25, 2
        // Predicated region
        $region65: #{tpu_custom_call.1} parent=55 // pred_check
          %p400 = pneg %p399
        $region66: #{tpu_custom_call.1} parent=55 // pred_check_branch
          %402 = sbr.rel (%p400) target = $region68
        $region67: #{tpu_custom_call.1} parent=55 // pred_region
          %v403 = vld [vmem:[%s382] sm:$0xff]
          %v404 = vld [vmem:[%s382 + $0x8] sm:$0xff]
          %v405 = vld [vmem:[%s382 + $0x10] sm:$0xf]
          %v406 = vunpack.c.l.s8.bf16 %v403
          %v407 = vunpack.c.h.s8.bf16 %v403
          %v408 = vunpack.c.l.s8.bf16 %v404
          %v409 = vunpack.c.h.s8.bf16 %v404
          %v410 = vunpack.c.l.s8.bf16 %v405
          %v411 = vld [vmem:[#allocation2] sm:$0xff]
          %v412 = vld [vmem:[%s335] sm:$0xf]
          %v413 = vld [vmem:[%s335 + $0x4] sm:$0xf]
          %v414 = vld [vmem:[%s335 + $0x8] sm:$0xf]
          %v415 = vld [vmem:[%s335 + $0xc] sm:$0xf]
          %v416 = vld [vmem:[%s335 + $0x10] sm:$0xf]
          %v417 = vld [vmem:[%s335 + $0x14] sm:$0xf]
          %v418 = vld [vmem:[%s335 + $0x18] sm:$0xf]
          %v419 = vld [vmem:[%s335 + $0x1c] sm:$0xf]
          %v420 = vld [vmem:[%s335 + $0x20] sm:$0xf]
          %v421 = vld [vmem:[%s335 + $0x24] sm:$0xf]
          %v422 = vld [vmem:[%s335 + $0x28] sm:$0xf]
          %v423 = vld [vmem:[%s335 + $0x2c] sm:$0xf]
          %v424 = vld [vmem:[%s335 + $0x30] sm:$0xf]
          %v425 = vld [vmem:[%s335 + $0x34] sm:$0xf]
          %v426 = vld [vmem:[%s335 + $0x38] sm:$0xf]
          %v427 = vld [vmem:[%s335 + $0x3c] sm:$0xf]
          %v428 = vld [vmem:[%s335 + $0x40] sm:$0xf]
          %v429 = vld [vmem:[%s335 + $0x44] sm:$0xf]
          %v430 = vld [vmem:[%s335 + $0x48] sm:$0xf]
          %v431 = vld [vmem:[%s335 + $0x4c] sm:$0xf]
          %v432 = vld [vmem:[%s335 + $0x50] sm:$0xf]
          %v433 = vld [vmem:[%s335 + $0x54] sm:$0xf]
          %v434 = vld [vmem:[%s335 + $0x58] sm:$0xf]
          %v435 = vld [vmem:[%s335 + $0x5c] sm:$0xf]
          %v436 = vld [vmem:[%s335 + $0x60] sm:$0xf]
          %v437 = vld [vmem:[%s335 + $0x64] sm:$0xf]
          %v438 = vld [vmem:[%s335 + $0x68] sm:$0xf]
          %v439 = vld [vmem:[%s335 + $0x6c] sm:$0xf]
          %v440 = vld [vmem:[%s335 + $0x70] sm:$0xf]
          %v441 = vld [vmem:[%s335 + $0x74] sm:$0xf]
          %v442 = vld [vmem:[%s335 + $0x78] sm:$0xf]
          %v443 = vld [vmem:[%s335 + $0x7c] sm:$0xf]
          %v444 = vld [vmem:[%s335 + $0x80] sm:$0xf]
          %v445 = vld [vmem:[%s335 + $0x84] sm:$0xf]
          %v446 = vld [vmem:[%s335 + $0x88] sm:$0xf]
          %v447 = vld [vmem:[%s335 + $0x8c] sm:$0xf]
          %v448 = vld [vmem:[%s335 + $0x90] sm:$0xf]
          %v449 = vld [vmem:[%s335 + $0x94] sm:$0xf]
          %v450 = vld [vmem:[%s335 + $0x98] sm:$0xf]
          %v451 = vld [vmem:[%s335 + $0x9c] sm:$0xf]
          %v452 = vld [vmem:[%s335 + $0xa0] sm:$0xf]
          %v453 = vld [vmem:[%s335 + $0xa4] sm:$0xf]
          %v454 = vld [vmem:[%s335 + $0xa8] sm:$0xf]
          %v455 = vld [vmem:[%s335 + $0xac] sm:$0xf]
          %v456 = vld [vmem:[%s335 + $0xb0] sm:$0xf]
          %v457 = vld [vmem:[%s335 + $0xb4] sm:$0xf]
          %v458 = vld [vmem:[%s335 + $0xb8] sm:$0xf]
          %v459 = vld [vmem:[%s335 + $0xbc] sm:$0xf]
          %v460 = vld [vmem:[%s335 + $0xc0] sm:$0xf]
          %v461 = vld [vmem:[%s335 + $0xc4] sm:$0xf]
          %v462 = vld [vmem:[%s335 + $0xc8] sm:$0xf]
          %v463 = vld [vmem:[%s335 + $0xcc] sm:$0xf]
          %v464 = vld [vmem:[%s335 + $0xd0] sm:$0xf]
          %v465 = vld [vmem:[%s335 + $0xd4] sm:$0xf]
          %v466 = vld [vmem:[%s335 + $0xd8] sm:$0xf]
          %v467 = vld [vmem:[%s335 + $0xdc] sm:$0xf]
          %v468 = vld [vmem:[%s335 + $0xe0] sm:$0xf]
          %v469 = vld [vmem:[%s335 + $0xe4] sm:$0xf]
          %v470 = vld [vmem:[%s335 + $0xe8] sm:$0xf]
          %v471 = vld [vmem:[%s335 + $0xec] sm:$0xf]
          %v472 = vld [vmem:[%s335 + $0xf0] sm:$0xf]
          %v473 = vld [vmem:[%s335 + $0xf4] sm:$0xf]
          %v474 = vld [vmem:[%s335 + $0xf8] sm:$0xf]
          %v475 = vld [vmem:[%s335 + $0xfc] sm:$0xf]
          %v476 = vld [vmem:[%s335 + $0x100] sm:$0xf]
          %v477 = vld [vmem:[%s335 + $0x104] sm:$0xf]
          %v478 = vld [vmem:[%s335 + $0x108] sm:$0xf]
          %v479 = vld [vmem:[%s335 + $0x10c] sm:$0xf]
          %v480 = vld [vmem:[%s335 + $0x110] sm:$0xf]
          %v481 = vld [vmem:[%s335 + $0x114] sm:$0xf]
          %v482 = vld [vmem:[%s335 + $0x118] sm:$0xf]
          %v483 = vld [vmem:[%s335 + $0x11c] sm:$0xf]
          %v484 = vld [vmem:[%s335 + $0x120] sm:$0xf]
          %v485 = vld [vmem:[%s335 + $0x124] sm:$0xf]
          %v486 = vld [vmem:[%s335 + $0x128] sm:$0xf]
          %v487 = vld [vmem:[%s335 + $0x12c] sm:$0xf]
          %v488 = vld [vmem:[%s335 + $0x130] sm:$0xf]
          %v489 = vld [vmem:[%s335 + $0x134] sm:$0xf]
          %v490 = vld [vmem:[%s335 + $0x138] sm:$0xf]
          %v491 = vld [vmem:[%s335 + $0x13c] sm:$0xf]
          %v492 = vld [vmem:[%s335 + $0x140] sm:$0xf]
          %v493 = vld [vmem:[%s335 + $0x144] sm:$0xf]
          %v494 = vld [vmem:[%s335 + $0x148] sm:$0xf]
          %v495 = vld [vmem:[%s335 + $0x14c] sm:$0xf]
          %v496 = vld [vmem:[%s335 + $0x150] sm:$0xf]
          %v497 = vld [vmem:[%s335 + $0x154] sm:$0xf]
          %v498 = vld [vmem:[%s335 + $0x158] sm:$0xf]
          %v499 = vld [vmem:[%s335 + $0x15c] sm:$0xf]
          %v500 = vld [vmem:[%s335 + $0x160] sm:$0xf]
          %v501 = vld [vmem:[%s335 + $0x164] sm:$0xf]
          %v502 = vld [vmem:[%s335 + $0x168] sm:$0xf]
          %v503 = vld [vmem:[%s335 + $0x16c] sm:$0xf]
          %v504 = vld [vmem:[%s335 + $0x170] sm:$0xf]
          %v505 = vld [vmem:[%s335 + $0x174] sm:$0xf]
          %v506 = vld [vmem:[%s335 + $0x178] sm:$0xf]
          %v507 = vld [vmem:[%s335 + $0x17c] sm:$0xf]
          %v508 = vld [vmem:[%s335 + $0x180] sm:$0xf]
          %v509 = vld [vmem:[%s335 + $0x184] sm:$0xf]
          %v510 = vld [vmem:[%s335 + $0x188] sm:$0xf]
          %v511 = vld [vmem:[%s335 + $0x18c] sm:$0xf]
          %v512 = vld [vmem:[%s335 + $0x190] sm:$0xf]
          %v513 = vld [vmem:[%s335 + $0x194] sm:$0xf]
          %v514 = vld [vmem:[%s335 + $0x198] sm:$0xf]
          %v515 = vld [vmem:[%s335 + $0x19c] sm:$0xf]
          %v516 = vld [vmem:[%s335 + $0x1a0] sm:$0xf]
          %v517 = vld [vmem:[%s335 + $0x1a4] sm:$0xf]
          %v518 = vld [vmem:[%s335 + $0x1a8] sm:$0xf]
          %v519 = vld [vmem:[%s335 + $0x1ac] sm:$0xf]
          %v520 = vld [vmem:[%s335 + $0x1b0] sm:$0xf]
          %v521 = vld [vmem:[%s335 + $0x1b4] sm:$0xf]
          %v522 = vld [vmem:[%s335 + $0x1b8] sm:$0xf]
          %v523 = vld [vmem:[%s335 + $0x1bc] sm:$0xf]
          %v524 = vld [vmem:[%s335 + $0x1c0] sm:$0xf]
          %v525 = vld [vmem:[%s335 + $0x1c4] sm:$0xf]
          %v526 = vld [vmem:[%s335 + $0x1c8] sm:$0xf]
          %v527 = vld [vmem:[%s335 + $0x1cc] sm:$0xf]
          %v528 = vld [vmem:[%s335 + $0x1d0] sm:$0xf]
          %v529 = vld [vmem:[%s335 + $0x1d4] sm:$0xf]
          %v530 = vld [vmem:[%s335 + $0x1d8] sm:$0xf]
          %v531 = vld [vmem:[%s335 + $0x1dc] sm:$0xf]
          %v532 = vld [vmem:[%s335 + $0x1e0] sm:$0xf]
          %v533 = vld [vmem:[%s335 + $0x1e4] sm:$0xf]
          %v534 = vld [vmem:[%s335 + $0x1e8] sm:$0xf]
          %v535 = vld [vmem:[%s335 + $0x1ec] sm:$0xf]
          %v536 = vld [vmem:[%s335 + $0x1f0] sm:$0xf]
          %v537 = vld [vmem:[%s335 + $0x1f4] sm:$0xf]
          %v538 = vld [vmem:[%s335 + $0x1f8] sm:$0xf]
          %v539 = vld [vmem:[%s335 + $0x1fc] sm:$0xf]
          %v540 = vld [vmem:[%s335 + $0x200] sm:$0xf]
          %v541 = vld [vmem:[%s335 + $0x204] sm:$0xf]
          %v542 = vld [vmem:[%s335 + $0x208] sm:$0xf]
          %v543 = vld [vmem:[%s335 + $0x20c] sm:$0xf]
          %v544 = vld [vmem:[%s335 + $0x210] sm:$0xf]
          %v545 = vld [vmem:[%s335 + $0x214] sm:$0xf]
          %v546 = vld [vmem:[%s335 + $0x218] sm:$0xf]
          %v547 = vld [vmem:[%s335 + $0x21c] sm:$0xf]
          %v548 = vld [vmem:[%s335 + $0x220] sm:$0xf]
          %v549 = vld [vmem:[%s335 + $0x224] sm:$0xf]
          %v550 = vld [vmem:[%s335 + $0x228] sm:$0xf]
          %v551 = vld [vmem:[%s335 + $0x22c] sm:$0xf]
          %v552 = vld [vmem:[%s335 + $0x230] sm:$0xf]
          %v553 = vld [vmem:[%s335 + $0x234] sm:$0xf]
          %v554 = vld [vmem:[%s335 + $0x238] sm:$0xf]
          %v555 = vld [vmem:[%s335 + $0x23c] sm:$0xf]
          %v556 = vld [vmem:[%s335 + $0x240] sm:$0xf]
          %v557 = vld [vmem:[%s335 + $0x244] sm:$0xf]
          %v558 = vld [vmem:[%s335 + $0x248] sm:$0xf]
          %v559 = vld [vmem:[%s335 + $0x24c] sm:$0xf]
          %v560 = vld [vmem:[%s335 + $0x250] sm:$0xf]
          %v561 = vld [vmem:[%s335 + $0x254] sm:$0xf]
          %v562 = vld [vmem:[%s335 + $0x258] sm:$0xf]
          %v563 = vld [vmem:[%s335 + $0x25c] sm:$0xf]
          %v564 = vld [vmem:[%s335 + $0x260] sm:$0xf]
          %v565 = vld [vmem:[%s335 + $0x264] sm:$0xf]
          %v566 = vld [vmem:[%s335 + $0x268] sm:$0xf]
          %v567 = vld [vmem:[%s335 + $0x26c] sm:$0xf]
          %v568 = vld [vmem:[%s335 + $0x270] sm:$0xf]
          %v569 = vld [vmem:[%s335 + $0x274] sm:$0xf]
          %v570 = vld [vmem:[%s335 + $0x278] sm:$0xf]
          %v571 = vld [vmem:[%s335 + $0x27c] sm:$0xf]
          %v577 = vunpack.c.l.b16 %v406
          %v578 = vunpack.c.h.b16 %v406
          %v579 = vunpack.c.l.b16 %v407
          %v580 = vunpack.c.h.b16 %v407
          %v581 = vunpack.c.l.b16 %v408
          %v582 = vunpack.c.h.b16 %v408
          %v583 = vunpack.c.l.b16 %v409
          %v584 = vunpack.c.h.b16 %v409
          %v585 = vunpack.c.l.b16 %v410
          %v586 = vunpack.c.h.b16 %v410
          %v587 = vpack.c.b16 %v577, %v577
          %v588 = vpack.c.b16 %v578, %v578
          %v589 = vpack.c.b16 %v579, %v579
          %v590 = vpack.c.b16 %v580, %v580
          %v591 = vpack.c.b16 %v581, %v581
          %v592 = vpack.c.b16 %v582, %v582
          %v593 = vpack.c.b16 %v583, %v583
          %v594 = vpack.c.b16 %v584, %v584
          %v595 = vpack.c.b16 %v585, %v585
          %v596 = vpack.c.b16 %v586, %v586
          %v767 = vunpack.c.l.b16 %v412
          %v768 = vunpack.c.l.b16 %v413
          %v769 = vunpack.c.l.b16 %v414
          %v770 = vunpack.c.l.b16 %v415
          %v771 = vunpack.c.l.b16 %v416
          %v772 = vunpack.c.l.b16 %v417
          %v773 = vunpack.c.l.b16 %v418
          %v774 = vunpack.c.l.b16 %v419
          %v775 = vunpack.c.l.b16 %v420
          %v776 = vunpack.c.l.b16 %v421
          %v777 = vunpack.c.l.b16 %v422
          %v778 = vunpack.c.l.b16 %v423
          %v779 = vunpack.c.l.b16 %v424
          %v780 = vunpack.c.l.b16 %v425
          %v781 = vunpack.c.l.b16 %v426
          %v782 = vunpack.c.l.b16 %v427
          %v783 = vunpack.c.l.b16 %v428
          %v784 = vunpack.c.l.b16 %v429
          %v785 = vunpack.c.l.b16 %v430
          %v786 = vunpack.c.l.b16 %v431
          %v787 = vunpack.c.l.b16 %v432
          %v788 = vunpack.c.l.b16 %v433
          %v789 = vunpack.c.l.b16 %v434
          %v790 = vunpack.c.l.b16 %v435
          %v791 = vunpack.c.l.b16 %v436
          %v792 = vunpack.c.l.b16 %v437
          %v793 = vunpack.c.l.b16 %v438
          %v794 = vunpack.c.l.b16 %v439
          %v795 = vunpack.c.l.b16 %v440
          %v796 = vunpack.c.l.b16 %v441
          %v797 = vunpack.c.l.b16 %v442
          %v798 = vunpack.c.l.b16 %v443
          %v799 = vunpack.c.l.b16 %v444
          %v800 = vunpack.c.l.b16 %v445
          %v801 = vunpack.c.l.b16 %v446
          %v802 = vunpack.c.l.b16 %v447
          %v803 = vunpack.c.l.b16 %v448
          %v804 = vunpack.c.l.b16 %v449
          %v805 = vunpack.c.l.b16 %v450
          %v806 = vunpack.c.l.b16 %v451
          %v807 = vunpack.c.l.b16 %v452
          %v808 = vunpack.c.l.b16 %v453
          %v809 = vunpack.c.l.b16 %v454
          %v810 = vunpack.c.l.b16 %v455
          %v811 = vunpack.c.l.b16 %v456
          %v812 = vunpack.c.l.b16 %v457
          %v813 = vunpack.c.l.b16 %v458
          %v814 = vunpack.c.l.b16 %v459
          %v815 = vunpack.c.l.b16 %v460
          %v816 = vunpack.c.l.b16 %v461
          %v817 = vunpack.c.l.b16 %v462
          %v818 = vunpack.c.l.b16 %v463
          %v819 = vunpack.c.l.b16 %v464
          %v820 = vunpack.c.l.b16 %v465
          %v821 = vunpack.c.l.b16 %v466
          %v822 = vunpack.c.l.b16 %v467
          %v823 = vunpack.c.l.b16 %v468
          %v824 = vunpack.c.l.b16 %v469
          %v825 = vunpack.c.l.b16 %v470
          %v826 = vunpack.c.l.b16 %v471
          %v827 = vunpack.c.l.b16 %v472
          %v828 = vunpack.c.l.b16 %v473
          %v829 = vunpack.c.l.b16 %v474
          %v830 = vunpack.c.l.b16 %v475
          %v831 = vunpack.c.l.b16 %v476
          %v832 = vunpack.c.l.b16 %v477
          %v833 = vunpack.c.l.b16 %v478
          %v834 = vunpack.c.l.b16 %v479
          %v835 = vunpack.c.l.b16 %v480
          %v836 = vunpack.c.l.b16 %v481
          %v837 = vunpack.c.l.b16 %v482
          %v838 = vunpack.c.l.b16 %v483
          %v839 = vunpack.c.l.b16 %v484
          %v840 = vunpack.c.l.b16 %v485
          %v841 = vunpack.c.l.b16 %v486
          %v842 = vunpack.c.l.b16 %v487
          %v843 = vunpack.c.l.b16 %v488
          %v844 = vunpack.c.l.b16 %v489
          %v845 = vunpack.c.l.b16 %v490
          %v846 = vunpack.c.l.b16 %v491
          %v847 = vunpack.c.l.b16 %v492
          %v848 = vunpack.c.l.b16 %v493
          %v849 = vunpack.c.l.b16 %v494
          %v850 = vunpack.c.l.b16 %v495
          %v851 = vunpack.c.l.b16 %v496
          %v852 = vunpack.c.l.b16 %v497
          %v853 = vunpack.c.l.b16 %v498
          %v854 = vunpack.c.l.b16 %v499
          %v855 = vunpack.c.l.b16 %v500
          %v856 = vunpack.c.l.b16 %v501
          %v857 = vunpack.c.l.b16 %v502
          %v858 = vunpack.c.l.b16 %v503
          %v859 = vunpack.c.l.b16 %v504
          %v860 = vunpack.c.l.b16 %v505
          %v861 = vunpack.c.l.b16 %v506
          %v862 = vunpack.c.l.b16 %v507
          %v863 = vunpack.c.l.b16 %v508
          %v864 = vunpack.c.l.b16 %v509
          %v865 = vunpack.c.l.b16 %v510
          %v866 = vunpack.c.l.b16 %v511
          %v867 = vunpack.c.l.b16 %v512
          %v868 = vunpack.c.l.b16 %v513
          %v869 = vunpack.c.l.b16 %v514
          %v870 = vunpack.c.l.b16 %v515
          %v871 = vunpack.c.l.b16 %v516
          %v872 = vunpack.c.l.b16 %v517
          %v873 = vunpack.c.l.b16 %v518
          %v874 = vunpack.c.l.b16 %v519
          %v875 = vunpack.c.l.b16 %v520
          %v876 = vunpack.c.l.b16 %v521
          %v877 = vunpack.c.l.b16 %v522
          %v878 = vunpack.c.l.b16 %v523
          %v879 = vunpack.c.l.b16 %v524
          %v880 = vunpack.c.l.b16 %v525
          %v881 = vunpack.c.l.b16 %v526
          %v882 = vunpack.c.l.b16 %v527
          %v883 = vunpack.c.l.b16 %v528
          %v884 = vunpack.c.l.b16 %v529
          %v885 = vunpack.c.l.b16 %v530
          %v886 = vunpack.c.l.b16 %v531
          %v887 = vunpack.c.l.b16 %v532
          %v888 = vunpack.c.l.b16 %v533
          %v889 = vunpack.c.l.b16 %v534
          %v890 = vunpack.c.l.b16 %v535
          %v891 = vunpack.c.l.b16 %v536
          %v892 = vunpack.c.l.b16 %v537
          %v893 = vunpack.c.l.b16 %v538
          %v894 = vunpack.c.l.b16 %v539
          %v895 = vunpack.c.l.b16 %v540
          %v896 = vunpack.c.l.b16 %v541
          %v897 = vunpack.c.l.b16 %v542
          %v898 = vunpack.c.l.b16 %v543
          %v899 = vunpack.c.l.b16 %v544
          %v900 = vunpack.c.l.b16 %v545
          %v901 = vunpack.c.l.b16 %v546
          %v902 = vunpack.c.l.b16 %v547
          %v903 = vunpack.c.l.b16 %v548
          %v904 = vunpack.c.l.b16 %v549
          %v905 = vunpack.c.l.b16 %v550
          %v906 = vunpack.c.l.b16 %v551
          %v907 = vunpack.c.l.b16 %v552
          %v908 = vunpack.c.l.b16 %v553
          %v909 = vunpack.c.l.b16 %v554
          %v910 = vunpack.c.l.b16 %v555
          %v911 = vunpack.c.l.b16 %v556
          %v912 = vunpack.c.l.b16 %v557
          %v913 = vunpack.c.l.b16 %v558
          %v914 = vunpack.c.l.b16 %v559
          %v915 = vunpack.c.l.b16 %v560
          %v916 = vunpack.c.l.b16 %v561
          %v917 = vunpack.c.l.b16 %v562
          %v918 = vunpack.c.l.b16 %v563
          %v919 = vunpack.c.l.b16 %v564
          %v920 = vunpack.c.l.b16 %v565
          %v921 = vunpack.c.l.b16 %v566
          %v922 = vunpack.c.l.b16 %v567
          %v923 = vunpack.c.l.b16 %v568
          %v924 = vunpack.c.l.b16 %v569
          %v925 = vunpack.c.l.b16 %v570
          %v926 = vunpack.c.l.b16 %v571
          %v927 = vpack.c.b16 %v768, %v767
          %v928 = vpack.c.b16 %v770, %v769
          %v929 = vpack.c.b16 %v772, %v771
          %v930 = vpack.c.b16 %v774, %v773
          %v931 = vpack.c.b16 %v776, %v775
          %v932 = vpack.c.b16 %v778, %v777
          %v933 = vpack.c.b16 %v780, %v779
          %v934 = vpack.c.b16 %v782, %v781
          %v935 = vpack.c.b16 %v784, %v783
          %v936 = vpack.c.b16 %v786, %v785
          %v937 = vpack.c.b16 %v788, %v787
          %v938 = vpack.c.b16 %v790, %v789
          %v939 = vpack.c.b16 %v792, %v791
          %v940 = vpack.c.b16 %v794, %v793
          %v941 = vpack.c.b16 %v796, %v795
          %v942 = vpack.c.b16 %v798, %v797
          %v943 = vpack.c.b16 %v800, %v799
          %v944 = vpack.c.b16 %v802, %v801
          %v945 = vpack.c.b16 %v804, %v803
          %v946 = vpack.c.b16 %v806, %v805
          %v947 = vpack.c.b16 %v808, %v807
          %v948 = vpack.c.b16 %v810, %v809
          %v949 = vpack.c.b16 %v812, %v811
          %v950 = vpack.c.b16 %v814, %v813
          %v951 = vpack.c.b16 %v816, %v815
          %v952 = vpack.c.b16 %v818, %v817
          %v953 = vpack.c.b16 %v820, %v819
          %v954 = vpack.c.b16 %v822, %v821
          %v955 = vpack.c.b16 %v824, %v823
          %v956 = vpack.c.b16 %v826, %v825
          %v957 = vpack.c.b16 %v828, %v827
          %v958 = vpack.c.b16 %v830, %v829
          %v959 = vpack.c.b16 %v832, %v831
          %v960 = vpack.c.b16 %v834, %v833
          %v961 = vpack.c.b16 %v836, %v835
          %v962 = vpack.c.b16 %v838, %v837
          %v963 = vpack.c.b16 %v840, %v839
          %v964 = vpack.c.b16 %v842, %v841
          %v965 = vpack.c.b16 %v844, %v843
          %v966 = vpack.c.b16 %v846, %v845
          %v967 = vpack.c.b16 %v848, %v847
          %v968 = vpack.c.b16 %v850, %v849
          %v969 = vpack.c.b16 %v852, %v851
          %v970 = vpack.c.b16 %v854, %v853
          %v971 = vpack.c.b16 %v856, %v855
          %v972 = vpack.c.b16 %v858, %v857
          %v973 = vpack.c.b16 %v860, %v859
          %v974 = vpack.c.b16 %v862, %v861
          %v975 = vpack.c.b16 %v864, %v863
          %v976 = vpack.c.b16 %v866, %v865
          %v977 = vpack.c.b16 %v868, %v867
          %v978 = vpack.c.b16 %v870, %v869
          %v979 = vpack.c.b16 %v872, %v871
          %v980 = vpack.c.b16 %v874, %v873
          %v981 = vpack.c.b16 %v876, %v875
          %v982 = vpack.c.b16 %v878, %v877
          %v983 = vpack.c.b16 %v880, %v879
          %v984 = vpack.c.b16 %v882, %v881
          %v985 = vpack.c.b16 %v884, %v883
          %v986 = vpack.c.b16 %v886, %v885
          %v987 = vpack.c.b16 %v888, %v887
          %v988 = vpack.c.b16 %v890, %v889
          %v989 = vpack.c.b16 %v892, %v891
          %v990 = vpack.c.b16 %v894, %v893
          %v991 = vpack.c.b16 %v896, %v895
          %v992 = vpack.c.b16 %v898, %v897
          %v993 = vpack.c.b16 %v900, %v899
          %v994 = vpack.c.b16 %v902, %v901
          %v995 = vpack.c.b16 %v904, %v903
          %v996 = vpack.c.b16 %v906, %v905
          %v997 = vpack.c.b16 %v908, %v907
          %v998 = vpack.c.b16 %v910, %v909
          %v999 = vpack.c.b16 %v912, %v911
          %v1000 = vpack.c.b16 %v914, %v913
          %v1001 = vpack.c.b16 %v916, %v915
          %v1002 = vpack.c.b16 %v918, %v917
          %v1003 = vpack.c.b16 %v920, %v919
          %v1004 = vpack.c.b16 %v922, %v921
          %v1005 = vpack.c.b16 %v924, %v923
          %v1006 = vpack.c.b16 %v926, %v925
          %1087 = vmatprep.subr.bf16.mxu0 0
          %1088 = vmatpush1.bf16.msra.mxu0 %v927
          %1089 = vmatprep.subr.bf16.mxu0 0
          %1090 = vmatpush1.bf16.msra.mxu0 %v928
          %1091 = vmatprep.subr.bf16.mxu0 0
          %1092 = vmatpush1.bf16.msra.mxu0 %v929
          %1093 = vmatprep.subr.bf16.mxu0 0
          %1094 = vmatpush1.bf16.msra.mxu0 %v930
          %1095 = vmatprep.subr.bf16.mxu0 0
          %1096 = vmatpush1.bf16.msra.mxu0 %v931
          %1097 = vmatprep.subr.bf16.mxu0 0
          %1098 = vmatpush1.bf16.msra.mxu0 %v932
          %1099 = vmatprep.subr.bf16.mxu0 0
          %1100 = vmatpush1.bf16.msra.mxu0 %v933
          %1101 = vmatprep.subr.bf16.mxu0 0
          %1102 = vmatpush1.bf16.msra.mxu0 %v934
          %1103 = vmatprep.subr.bf16.mxu0 0
          %1104 = vmatpush1.bf16.msra.mxu0 %v935
          %1105 = vmatprep.subr.bf16.mxu0 0
          %1106 = vmatpush1.bf16.msra.mxu0 %v936
          %1107 = vmatprep.subr.bf16.mxu0 0
          %1108 = vmatpush1.bf16.msra.mxu0 %v937
          %1109 = vmatprep.subr.bf16.mxu0 0
          %1110 = vmatpush1.bf16.msra.mxu0 %v938
          %1111 = vmatprep.subr.bf16.mxu0 0
          %1112 = vmatpush1.bf16.msra.mxu0 %v939
          %1113 = vmatprep.subr.bf16.mxu0 0
          %1114 = vmatpush1.bf16.msra.mxu0 %v940
          %1115 = vmatprep.subr.bf16.mxu0 0
          %1116 = vmatpush1.bf16.msra.mxu0 %v941
          %1117 = vmatprep.subr.bf16.mxu0 0
          %1118 = vmatpush1.bf16.msra.mxu0 %v942
          %1119 = vmatprep.mubr.bf16.mxu0 %v588
          %1120 = vmatmul.mubr.bf16.gmra.mrb[0].mxu0 %v587
          %v1121 = vpop.f32.mrb[0].mxu0
          %v1122 = vadd.f32 0.0, %v1121
          %v1123 = vpop.f32.mrb[0].mxu0
          %v1124 = vpop.f32.mrb[0].mxu0
          %v1125 = vpop.f32.mrb[0].mxu0
          %1126 = vdwg.mxu0
          %1127 = vmatprep.subr.bf16.mxu0 0
          %1128 = vmatpush1.bf16.msra.mxu0 %v943
          %1129 = vmatprep.subr.bf16.mxu0 0
          %1130 = vmatpush1.bf16.msra.mxu0 %v944
          %1131 = vmatprep.subr.bf16.mxu0 0
          %1132 = vmatpush1.bf16.msra.mxu0 %v945
          %1133 = vmatprep.subr.bf16.mxu0 0
          %1134 = vmatpush1.bf16.msra.mxu0 %v946
          %1135 = vmatprep.subr.bf16.mxu0 0
          %1136 = vmatpush1.bf16.msra.mxu0 %v947
          %1137 = vmatprep.subr.bf16.mxu0 0
          %1138 = vmatpush1.bf16.msra.mxu0 %v948
          %1139 = vmatprep.subr.bf16.mxu0 0
          %1140 = vmatpush1.bf16.msra.mxu0 %v949
          %1141 = vmatprep.subr.bf16.mxu0 0
          %1142 = vmatpush1.bf16.msra.mxu0 %v950
          %1143 = vmatprep.subr.bf16.mxu0 0
          %1144 = vmatpush1.bf16.msra.mxu0 %v951
          %1145 = vmatprep.subr.bf16.mxu0 0
          %1146 = vmatpush1.bf16.msra.mxu0 %v952
          %1147 = vmatprep.subr.bf16.mxu0 0
          %1148 = vmatpush1.bf16.msra.mxu0 %v953
          %1149 = vmatprep.subr.bf16.mxu0 0
          %1150 = vmatpush1.bf16.msra.mxu0 %v954
          %1151 = vmatprep.subr.bf16.mxu0 0
          %1152 = vmatpush1.bf16.msra.mxu0 %v955
          %1153 = vmatprep.subr.bf16.mxu0 0
          %1154 = vmatpush1.bf16.msra.mxu0 %v956
          %1155 = vmatprep.subr.bf16.mxu0 0
          %1156 = vmatpush1.bf16.msra.mxu0 %v957
          %1157 = vmatprep.subr.bf16.mxu0 0
          %1158 = vmatpush1.bf16.msra.mxu0 %v958
          %1159 = vmatprep.mubr.bf16.mxu0 %v590
          %1160 = vmatmul.mubr.bf16.gmra.mrb[0].mxu0 %v589
          %v1161 = vpop.f32.mrb[0].mxu0
          %v1162 = vadd.f32 %v1122, %v1161
          %v1163 = vpop.f32.mrb[0].mxu0
          %v1164 = vpop.f32.mrb[0].mxu0
          %v1165 = vpop.f32.mrb[0].mxu0
          %1166 = vdwg.mxu0
          %1167 = vmatprep.subr.bf16.mxu0 0
          %1168 = vmatpush1.bf16.msra.mxu0 %v959
          %1169 = vmatprep.subr.bf16.mxu0 0
          %1170 = vmatpush1.bf16.msra.mxu0 %v960
          %1171 = vmatprep.subr.bf16.mxu0 0
          %1172 = vmatpush1.bf16.msra.mxu0 %v961
          %1173 = vmatprep.subr.bf16.mxu0 0
          %1174 = vmatpush1.bf16.msra.mxu0 %v962
          %1175 = vmatprep.subr.bf16.mxu0 0
          %1176 = vmatpush1.bf16.msra.mxu0 %v963
          %1177 = vmatprep.subr.bf16.mxu0 0
          %1178 = vmatpush1.bf16.msra.mxu0 %v964
          %1179 = vmatprep.subr.bf16.mxu0 0
          %1180 = vmatpush1.bf16.msra.mxu0 %v965
          %1181 = vmatprep.subr.bf16.mxu0 0
          %1182 = vmatpush1.bf16.msra.mxu0 %v966
          %1183 = vmatprep.subr.bf16.mxu0 0
          %1184 = vmatpush1.bf16.msra.mxu0 %v967
          %1185 = vmatprep.subr.bf16.mxu0 0
          %1186 = vmatpush1.bf16.msra.mxu0 %v968
          %1187 = vmatprep.subr.bf16.mxu0 0
          %1188 = vmatpush1.bf16.msra.mxu0 %v969
          %1189 = vmatprep.subr.bf16.mxu0 0
          %1190 = vmatpush1.bf16.msra.mxu0 %v970
          %1191 = vmatprep.subr.bf16.mxu0 0
          %1192 = vmatpush1.bf16.msra.mxu0 %v971
          %1193 = vmatprep.subr.bf16.mxu0 0
          %1194 = vmatpush1.bf16.msra.mxu0 %v972
          %1195 = vmatprep.subr.bf16.mxu0 0
          %1196 = vmatpush1.bf16.msra.mxu0 %v973
          %1197 = vmatprep.subr.bf16.mxu0 0
          %1198 = vmatpush1.bf16.msra.mxu0 %v974
          %1199 = vmatprep.mubr.bf16.mxu0 %v592
          %1200 = vmatmul.mubr.bf16.gmra.mrb[0].mxu0 %v591
          %v1201 = vpop.f32.mrb[0].mxu0
          %v1202 = vadd.f32 %v1162, %v1201
          %v1203 = vpop.f32.mrb[0].mxu0
          %v1204 = vpop.f32.mrb[0].mxu0
          %v1205 = vpop.f32.mrb[0].mxu0
          %1206 = vdwg.mxu0
          %1207 = vmatprep.subr.bf16.mxu0 0
          %1208 = vmatpush1.bf16.msra.mxu0 %v975
          %1209 = vmatprep.subr.bf16.mxu0 0
          %1210 = vmatpush1.bf16.msra.mxu0 %v976
          %1211 = vmatprep.subr.bf16.mxu0 0
          %1212 = vmatpush1.bf16.msra.mxu0 %v977
          %1213 = vmatprep.subr.bf16.mxu0 0
          %1214 = vmatpush1.bf16.msra.mxu0 %v978
          %1215 = vmatprep.subr.bf16.mxu0 0
          %1216 = vmatpush1.bf16.msra.mxu0 %v979
          %1217 = vmatprep.subr.bf16.mxu0 0
          %1218 = vmatpush1.bf16.msra.mxu0 %v980
          %1219 = vmatprep.subr.bf16.mxu0 0
          %1220 = vmatpush1.bf16.msra.mxu0 %v981
          %1221 = vmatprep.subr.bf16.mxu0 0
          %1222 = vmatpush1.bf16.msra.mxu0 %v982
          %1223 = vmatprep.subr.bf16.mxu0 0
          %1224 = vmatpush1.bf16.msra.mxu0 %v983
          %1225 = vmatprep.subr.bf16.mxu0 0
          %1226 = vmatpush1.bf16.msra.mxu0 %v984
          %1227 = vmatprep.subr.bf16.mxu0 0
          %1228 = vmatpush1.bf16.msra.mxu0 %v985
          %1229 = vmatprep.subr.bf16.mxu0 0
          %1230 = vmatpush1.bf16.msra.mxu0 %v986
          %1231 = vmatprep.subr.bf16.mxu0 0
          %1232 = vmatpush1.bf16.msra.mxu0 %v987
          %1233 = vmatprep.subr.bf16.mxu0 0
          %1234 = vmatpush1.bf16.msra.mxu0 %v988
          %1235 = vmatprep.subr.bf16.mxu0 0
          %1236 = vmatpush1.bf16.msra.mxu0 %v989
          %1237 = vmatprep.subr.bf16.mxu0 0
          %1238 = vmatpush1.bf16.msra.mxu0 %v990
          %1239 = vmatprep.mubr.bf16.mxu0 %v594
          %1240 = vmatmul.mubr.bf16.gmra.mrb[0].mxu0 %v593
          %v1241 = vpop.f32.mrb[0].mxu0
          %v1242 = vadd.f32 %v1202, %v1241
          %v1243 = vpop.f32.mrb[0].mxu0
          %v1244 = vpop.f32.mrb[0].mxu0
          %v1245 = vpop.f32.mrb[0].mxu0
          %1246 = vdwg.mxu0
          %1247 = vmatprep.subr.bf16.mxu0 0
          %1248 = vmatpush1.bf16.msra.mxu0 %v991
          %1249 = vmatprep.subr.bf16.mxu0 0
          %1250 = vmatpush1.bf16.msra.mxu0 %v992
          %1251 = vmatprep.subr.bf16.mxu0 0
          %1252 = vmatpush1.bf16.msra.mxu0 %v993
          %1253 = vmatprep.subr.bf16.mxu0 0
          %1254 = vmatpush1.bf16.msra.mxu0 %v994
          %1255 = vmatprep.subr.bf16.mxu0 0
          %1256 = vmatpush1.bf16.msra.mxu0 %v995
          %1257 = vmatprep.subr.bf16.mxu0 0
          %1258 = vmatpush1.bf16.msra.mxu0 %v996
          %1259 = vmatprep.subr.bf16.mxu0 0
          %1260 = vmatpush1.bf16.msra.mxu0 %v997
          %1261 = vmatprep.subr.bf16.mxu0 0
          %1262 = vmatpush1.bf16.msra.mxu0 %v998
          %1263 = vmatprep.subr.bf16.mxu0 0
          %1264 = vmatpush1.bf16.msra.mxu0 %v999
          %1265 = vmatprep.subr.bf16.mxu0 0
          %1266 = vmatpush1.bf16.msra.mxu0 %v1000
          %1267 = vmatprep.subr.bf16.mxu0 0
          %1268 = vmatpush1.bf16.msra.mxu0 %v1001
          %1269 = vmatprep.subr.bf16.mxu0 0
          %1270 = vmatpush1.bf16.msra.mxu0 %v1002
          %1271 = vmatprep.subr.bf16.mxu0 0
          %1272 = vmatpush1.bf16.msra.mxu0 %v1003
          %1273 = vmatprep.subr.bf16.mxu0 0
          %1274 = vmatpush1.bf16.msra.mxu0 %v1004
          %1275 = vmatprep.subr.bf16.mxu0 0
          %1276 = vmatpush1.bf16.msra.mxu0 %v1005
          %1277 = vmatprep.subr.bf16.mxu0 0
          %1278 = vmatpush1.bf16.msra.mxu0 %v1006
          %1279 = vmatprep.mubr.bf16.mxu0 %v596
          %1280 = vmatmul.mubr.bf16.gmra.mrb[0].mxu0 %v595
          %v1281 = vpop.f32.mrb[0].mxu0
          %v1282 = vadd.f32 %v1242, %v1281
          %v1283 = vpop.f32.mrb[0].mxu0
          %v1284 = vpop.f32.mrb[0].mxu0
          %v1285 = vpop.f32.mrb[0].mxu0
          %1286 = vdwg.mxu0
          %v1287 = vadd.f32 %v411, %v1282
          %1288 = vst [vmem:[#allocation2] sm:$0xff] %v1287
        $region68: #{tpu_custom_call.1} parent=55 // pred_fallthru
          _
        %p1289 = scmp.eq.s32.totalorder %s25, 2
        // Predicated region
        $region69: #{tpu_custom_call.1} parent=55 // pred_check
          %p1290 = pneg %p1289
        $region70: #{tpu_custom_call.1} parent=55 // pred_check_branch
          %1292 = sbr.rel (%p1290) target = $region72
        $region71: #{tpu_custom_call.1} parent=55 // pred_region
          %v1293 = vld [vmem:[%s382] sm:$0xff]
          %v1294 = vunpack.c.l.s8.bf16 %v1293
          %v1295 = vunpack.c.h.s8.bf16 %v1293
          %v1296 = vld [vmem:[#allocation2] sm:$0xff]
          %v1297 = vld [vmem:[%s335] sm:$0xf]
          %v1298 = vld [vmem:[%s335 + $0x4] sm:$0xf]
          %v1299 = vld [vmem:[%s335 + $0x8] sm:$0xf]
          %v1300 = vld [vmem:[%s335 + $0xc] sm:$0xf]
          %v1301 = vld [vmem:[%s335 + $0x10] sm:$0xf]
          %v1302 = vld [vmem:[%s335 + $0x14] sm:$0xf]
          %v1303 = vld [vmem:[%s335 + $0x18] sm:$0xf]
          %v1304 = vld [vmem:[%s335 + $0x1c] sm:$0xf]
          %v1305 = vld [vmem:[%s335 + $0x20] sm:$0xf]
          %v1306 = vld [vmem:[%s335 + $0x24] sm:$0xf]
          %v1307 = vld [vmem:[%s335 + $0x28] sm:$0xf]
          %v1308 = vld [vmem:[%s335 + $0x2c] sm:$0xf]
          %v1309 = vld [vmem:[%s335 + $0x30] sm:$0xf]
          %v1310 = vld [vmem:[%s335 + $0x34] sm:$0xf]
          %v1311 = vld [vmem:[%s335 + $0x38] sm:$0xf]
          %v1312 = vld [vmem:[%s335 + $0x3c] sm:$0xf]
          %v1313 = vld [vmem:[%s335 + $0x40] sm:$0xf]
          %v1314 = vld [vmem:[%s335 + $0x44] sm:$0xf]
          %v1315 = vld [vmem:[%s335 + $0x48] sm:$0xf]
          %v1316 = vld [vmem:[%s335 + $0x4c] sm:$0xf]
          %v1317 = vld [vmem:[%s335 + $0x50] sm:$0xf]
          %v1318 = vld [vmem:[%s335 + $0x54] sm:$0xf]
          %v1319 = vld [vmem:[%s335 + $0x58] sm:$0xf]
          %v1320 = vld [vmem:[%s335 + $0x5c] sm:$0xf]
          %v1321 = vld [vmem:[%s335 + $0x60] sm:$0xf]
          %v1322 = vld [vmem:[%s335 + $0x64] sm:$0xf]
          %v1323 = vld [vmem:[%s335 + $0x68] sm:$0xf]
          %v1324 = vld [vmem:[%s335 + $0x6c] sm:$0xf]
          %v1325 = vld [vmem:[%s335 + $0x70] sm:$0xf]
          %v1326 = vld [vmem:[%s335 + $0x74] sm:$0xf]
          %v1327 = vld [vmem:[%s335 + $0x78] sm:$0xf]
          %v1328 = vld [vmem:[%s335 + $0x7c] sm:$0xf]
          %v1329 = vld [vmem:[%s335 + $0x80] sm:$0xf]
          %v1330 = vld [vmem:[%s335 + $0x84] sm:$0xf]
          %v1331 = vld [vmem:[%s335 + $0x88] sm:$0xf]
          %v1332 = vld [vmem:[%s335 + $0x8c] sm:$0xf]
          %v1333 = vld [vmem:[%s335 + $0x90] sm:$0xf]
          %v1334 = vld [vmem:[%s335 + $0x94] sm:$0xf]
          %v1335 = vld [vmem:[%s335 + $0x98] sm:$0xf]
          %v1336 = vld [vmem:[%s335 + $0x9c] sm:$0xf]
          %v1337 = vld [vmem:[%s335 + $0xa0] sm:$0xf]
          %v1338 = vld [vmem:[%s335 + $0xa4] sm:$0xf]
          %v1339 = vld [vmem:[%s335 + $0xa8] sm:$0xf]
          %v1340 = vld [vmem:[%s335 + $0xac] sm:$0xf]
          %v1341 = vld [vmem:[%s335 + $0xb0] sm:$0xf]
          %v1342 = vld [vmem:[%s335 + $0xb4] sm:$0xf]
          %v1343 = vld [vmem:[%s335 + $0xb8] sm:$0xf]
          %v1344 = vld [vmem:[%s335 + $0xbc] sm:$0xf]
          %v1345 = vld [vmem:[%s335 + $0xc0] sm:$0xf]
          %v1346 = vld [vmem:[%s335 + $0xc4] sm:$0xf]
          %v1347 = vld [vmem:[%s335 + $0xc8] sm:$0xf]
          %v1348 = vld [vmem:[%s335 + $0xcc] sm:$0xf]
          %v1349 = vld [vmem:[%s335 + $0xd0] sm:$0xf]
          %v1350 = vld [vmem:[%s335 + $0xd4] sm:$0xf]
          %v1351 = vld [vmem:[%s335 + $0xd8] sm:$0xf]
          %v1352 = vld [vmem:[%s335 + $0xdc] sm:$0xf]
          %v1353 = vld [vmem:[%s335 + $0xe0] sm:$0xf]
          %v1354 = vld [vmem:[%s335 + $0xe4] sm:$0xf]
          %v1355 = vld [vmem:[%s335 + $0xe8] sm:$0xf]
          %v1356 = vld [vmem:[%s335 + $0xec] sm:$0xf]
          %v1357 = vld [vmem:[%s335 + $0xf0] sm:$0xf]
          %v1358 = vld [vmem:[%s335 + $0xf4] sm:$0xf]
          %v1359 = vld [vmem:[%s335 + $0xf8] sm:$0xf]
          %v1360 = vld [vmem:[%s335 + $0xfc] sm:$0xf]
          %v1363 = vunpack.c.l.b16 %v1294
          %v1364 = vunpack.c.h.b16 %v1294
          %v1365 = vunpack.c.l.b16 %v1295
          %v1366 = vunpack.c.h.b16 %v1295
          %v1367 = vpack.c.b16 %v1363, %v1363
          %v1368 = vpack.c.b16 %v1364, %v1364
          %v1369 = vpack.c.b16 %v1365, %v1365
          %v1370 = vpack.c.b16 %v1366, %v1366
          %v1439 = vunpack.c.l.b16 %v1297
          %v1440 = vunpack.c.l.b16 %v1298
          %v1441 = vunpack.c.l.b16 %v1299
          %v1442 = vunpack.c.l.b16 %v1300
          %v1443 = vunpack.c.l.b16 %v1301
          %v1444 = vunpack.c.l.b16 %v1302
          %v1445 = vunpack.c.l.b16 %v1303
          %v1446 = vunpack.c.l.b16 %v1304
          %v1447 = vunpack.c.l.b16 %v1305
          %v1448 = vunpack.c.l.b16 %v1306
          %v1449 = vunpack.c.l.b16 %v1307
          %v1450 = vunpack.c.l.b16 %v1308
          %v1451 = vunpack.c.l.b16 %v1309
          %v1452 = vunpack.c.l.b16 %v1310
          %v1453 = vunpack.c.l.b16 %v1311
          %v1454 = vunpack.c.l.b16 %v1312
          %v1455 = vunpack.c.l.b16 %v1313
          %v1456 = vunpack.c.l.b16 %v1314
          %v1457 = vunpack.c.l.b16 %v1315
          %v1458 = vunpack.c.l.b16 %v1316
          %v1459 = vunpack.c.l.b16 %v1317
          %v1460 = vunpack.c.l.b16 %v1318
          %v1461 = vunpack.c.l.b16 %v1319
          %v1462 = vunpack.c.l.b16 %v1320
          %v1463 = vunpack.c.l.b16 %v1321
          %v1464 = vunpack.c.l.b16 %v1322
          %v1465 = vunpack.c.l.b16 %v1323
          %v1466 = vunpack.c.l.b16 %v1324
          %v1467 = vunpack.c.l.b16 %v1325
          %v1468 = vunpack.c.l.b16 %v1326
          %v1469 = vunpack.c.l.b16 %v1327
          %v1470 = vunpack.c.l.b16 %v1328
          %v1471 = vunpack.c.l.b16 %v1329
          %v1472 = vunpack.c.l.b16 %v1330
          %v1473 = vunpack.c.l.b16 %v1331
          %v1474 = vunpack.c.l.b16 %v1332
          %v1475 = vunpack.c.l.b16 %v1333
          %v1476 = vunpack.c.l.b16 %v1334
          %v1477 = vunpack.c.l.b16 %v1335
          %v1478 = vunpack.c.l.b16 %v1336
          %v1479 = vunpack.c.l.b16 %v1337
          %v1480 = vunpack.c.l.b16 %v1338
          %v1481 = vunpack.c.l.b16 %v1339
          %v1482 = vunpack.c.l.b16 %v1340
          %v1483 = vunpack.c.l.b16 %v1341
          %v1484 = vunpack.c.l.b16 %v1342
          %v1485 = vunpack.c.l.b16 %v1343
          %v1486 = vunpack.c.l.b16 %v1344
          %v1487 = vunpack.c.l.b16 %v1345
          %v1488 = vunpack.c.l.b16 %v1346
          %v1489 = vunpack.c.l.b16 %v1347
          %v1490 = vunpack.c.l.b16 %v1348
          %v1491 = vunpack.c.l.b16 %v1349
          %v1492 = vunpack.c.l.b16 %v1350
          %v1493 = vunpack.c.l.b16 %v1351
          %v1494 = vunpack.c.l.b16 %v1352
          %v1495 = vunpack.c.l.b16 %v1353
          %v1496 = vunpack.c.l.b16 %v1354
          %v1497 = vunpack.c.l.b16 %v1355
          %v1498 = vunpack.c.l.b16 %v1356
          %v1499 = vunpack.c.l.b16 %v1357
          %v1500 = vunpack.c.l.b16 %v1358
          %v1501 = vunpack.c.l.b16 %v1359
          %v1502 = vunpack.c.l.b16 %v1360
          %v1503 = vpack.c.b16 %v1440, %v1439
          %v1504 = vpack.c.b16 %v1442, %v1441
          %v1505 = vpack.c.b16 %v1444, %v1443
          %v1506 = vpack.c.b16 %v1446, %v1445
          %v1507 = vpack.c.b16 %v1448, %v1447
          %v1508 = vpack.c.b16 %v1450, %v1449
          %v1509 = vpack.c.b16 %v1452, %v1451
          %v1510 = vpack.c.b16 %v1454, %v1453
          %v1511 = vpack.c.b16 %v1456, %v1455
          %v1512 = vpack.c.b16 %v1458, %v1457
          %v1513 = vpack.c.b16 %v1460, %v1459
          %v1514 = vpack.c.b16 %v1462, %v1461
          %v1515 = vpack.c.b16 %v1464, %v1463
          %v1516 = vpack.c.b16 %v1466, %v1465
          %v1517 = vpack.c.b16 %v1468, %v1467
          %v1518 = vpack.c.b16 %v1470, %v1469
          %v1519 = vpack.c.b16 %v1472, %v1471
          %v1520 = vpack.c.b16 %v1474, %v1473
          %v1521 = vpack.c.b16 %v1476, %v1475
          %v1522 = vpack.c.b16 %v1478, %v1477
          %v1523 = vpack.c.b16 %v1480, %v1479
          %v1524 = vpack.c.b16 %v1482, %v1481
          %v1525 = vpack.c.b16 %v1484, %v1483
          %v1526 = vpack.c.b16 %v1486, %v1485
          %v1527 = vpack.c.b16 %v1488, %v1487
          %v1528 = vpack.c.b16 %v1490, %v1489
          %v1529 = vpack.c.b16 %v1492, %v1491
          %v1530 = vpack.c.b16 %v1494, %v1493
          %v1531 = vpack.c.b16 %v1496, %v1495
          %v1532 = vpack.c.b16 %v1498, %v1497
          %v1533 = vpack.c.b16 %v1500, %v1499
          %v1534 = vpack.c.b16 %v1502, %v1501
          %1567 = vmatprep.subr.bf16.mxu0 0
          %1568 = vmatpush1.bf16.msra.mxu0 %v1503
          %1569 = vmatprep.subr.bf16.mxu0 0
          %1570 = vmatpush1.bf16.msra.mxu0 %v1504
          %1571 = vmatprep.subr.bf16.mxu0 0
          %1572 = vmatpush1.bf16.msra.mxu0 %v1505
          %1573 = vmatprep.subr.bf16.mxu0 0
          %1574 = vmatpush1.bf16.msra.mxu0 %v1506
          %1575 = vmatprep.subr.bf16.mxu0 0
          %1576 = vmatpush1.bf16.msra.mxu0 %v1507
          %1577 = vmatprep.subr.bf16.mxu0 0
          %1578 = vmatpush1.bf16.msra.mxu0 %v1508
          %1579 = vmatprep.subr.bf16.mxu0 0
          %1580 = vmatpush1.bf16.msra.mxu0 %v1509
          %1581 = vmatprep.subr.bf16.mxu0 0
          %1582 = vmatpush1.bf16.msra.mxu0 %v1510
          %1583 = vmatprep.subr.bf16.mxu0 0
          %1584 = vmatpush1.bf16.msra.mxu0 %v1511
          %1585 = vmatprep.subr.bf16.mxu0 0
          %1586 = vmatpush1.bf16.msra.mxu0 %v1512
          %1587 = vmatprep.subr.bf16.mxu0 0
          %1588 = vmatpush1.bf16.msra.mxu0 %v1513
          %1589 = vmatprep.subr.bf16.mxu0 0
          %1590 = vmatpush1.bf16.msra.mxu0 %v1514
          %1591 = vmatprep.subr.bf16.mxu0 0
          %1592 = vmatpush1.bf16.msra.mxu0 %v1515
          %1593 = vmatprep.subr.bf16.mxu0 0
          %1594 = vmatpush1.bf16.msra.mxu0 %v1516
          %1595 = vmatprep.subr.bf16.mxu0 0
          %1596 = vmatpush1.bf16.msra.mxu0 %v1517
          %1597 = vmatprep.subr.bf16.mxu0 0
          %1598 = vmatpush1.bf16.msra.mxu0 %v1518
          %1599 = vmatprep.mubr.bf16.mxu0 %v1368
          %1600 = vmatmul.mubr.bf16.gmra.mrb[0].mxu0 %v1367
          %v1601 = vpop.f32.mrb[0].mxu0
          %v1602 = vadd.f32 0.0, %v1601
          %v1603 = vpop.f32.mrb[0].mxu0
          %v1604 = vpop.f32.mrb[0].mxu0
          %v1605 = vpop.f32.mrb[0].mxu0
          %1606 = vdwg.mxu0
          %1607 = vmatprep.subr.bf16.mxu0 0
          %1608 = vmatpush1.bf16.msra.mxu0 %v1519
          %1609 = vmatprep.subr.bf16.mxu0 0
          %1610 = vmatpush1.bf16.msra.mxu0 %v1520
          %1611 = vmatprep.subr.bf16.mxu0 0
          %1612 = vmatpush1.bf16.msra.mxu0 %v1521
          %1613 = vmatprep.subr.bf16.mxu0 0
          %1614 = vmatpush1.bf16.msra.mxu0 %v1522
          %1615 = vmatprep.subr.bf16.mxu0 0
          %1616 = vmatpush1.bf16.msra.mxu0 %v1523
          %1617 = vmatprep.subr.bf16.mxu0 0
          %1618 = vmatpush1.bf16.msra.mxu0 %v1524
          %1619 = vmatprep.subr.bf16.mxu0 0
          %1620 = vmatpush1.bf16.msra.mxu0 %v1525
          %1621 = vmatprep.subr.bf16.mxu0 0
          %1622 = vmatpush1.bf16.msra.mxu0 %v1526
          %1623 = vmatprep.subr.bf16.mxu0 0
          %1624 = vmatpush1.bf16.msra.mxu0 %v1527
          %1625 = vmatprep.subr.bf16.mxu0 0
          %1626 = vmatpush1.bf16.msra.mxu0 %v1528
          %1627 = vmatprep.subr.bf16.mxu0 0
          %1628 = vmatpush1.bf16.msra.mxu0 %v1529
          %1629 = vmatprep.subr.bf16.mxu0 0
          %1630 = vmatpush1.bf16.msra.mxu0 %v1530
          %1631 = vmatprep.subr.bf16.mxu0 0
          %1632 = vmatpush1.bf16.msra.mxu0 %v1531
          %1633 = vmatprep.subr.bf16.mxu0 0
          %1634 = vmatpush1.bf16.msra.mxu0 %v1532
          %1635 = vmatprep.subr.bf16.mxu0 0
          %1636 = vmatpush1.bf16.msra.mxu0 %v1533
          %1637 = vmatprep.subr.bf16.mxu0 0
          %1638 = vmatpush1.bf16.msra.mxu0 %v1534
          %1639 = vmatprep.mubr.bf16.mxu0 %v1370
          %1640 = vmatmul.mubr.bf16.gmra.mrb[0].mxu0 %v1369
          %v1641 = vpop.f32.mrb[0].mxu0
          %v1642 = vadd.f32 %v1602, %v1641
          %v1643 = vpop.f32.mrb[0].mxu0
          %v1644 = vpop.f32.mrb[0].mxu0
          %v1645 = vpop.f32.mrb[0].mxu0
          %1646 = vdwg.mxu0
          %v1647 = vadd.f32 %v1296, %v1642
          %1648 = vst [vmem:[#allocation2] sm:$0xff] %v1647
          %v1649 = vld [vmem:[#allocation2] sm:$0xff]
          %v1650 = vld [vmem:[%s2] sm:$0x1]
          %v1652 = vlaneseq
          %v1653 = vshrl.u32 %v1652, 7
          %v1654 = vsub.s32 0, %v1653
          %v1655 = vrot.slane %v1650, %v1654
          %v1657 = vadd.f32 %v1649, %v1655
          %v1658 = vmax.f32 %v1657, 0.0
          %v1659 = vmin.f32 %v1658, 1.0
          %v1660 = vld [vmem:[%s3] sm:$0xff]
          %v1661 = vld [vmem:[%s3 + $0x8] sm:$0xff]
          %v1662 = vld [vmem:[%s3 + $0x10] sm:$0xff]
          %v1663 = vld [vmem:[%s3 + $0x18] sm:$0xff]
          %v1664 = vld [vmem:[%s3 + $0x20] sm:$0xff]
          %v1665 = vld [vmem:[%s3 + $0x28] sm:$0xff]
          %v1666 = vld [vmem:[%s3 + $0x30] sm:$0xff]
          %v1667 = vld [vmem:[%s3 + $0x38] sm:$0xff]
          %v1668 = vld [vmem:[%s3 + $0x40] sm:$0xff]
          %v1669 = vld [vmem:[%s3 + $0x48] sm:$0xff]
          %v1670 = vld [vmem:[%s3 + $0x50] sm:$0xff]
          %v1671 = vld [vmem:[%s3 + $0x58] sm:$0xff]
          %v1672 = vld [vmem:[%s3 + $0x60] sm:$0xff]
          %v1673 = vld [vmem:[%s3 + $0x68] sm:$0xff]
          %v1674 = vld [vmem:[%s3 + $0x70] sm:$0xff]
          %v1675 = vld [vmem:[%s3 + $0x78] sm:$0xff]
          %v1676 = vld [vmem:[%s4] sm:$0x1]
          %v1678 = vlaneseq
          %v1679 = vshrl.u32 %v1678, 7
          %v1680 = vsub.s32 0, %v1679
          %v1681 = vrot.slane %v1676, %v1680
          %1683 = vmatprep.subr.mxu0 0.0
          %1684 = vmatpush1.msra.mxu0 %v1660
          %1685 = vmatprep.subr.mxu0 0.0
          %1686 = vmatpush1.msra.mxu0 %v1661
          %1687 = vmatprep.subr.mxu0 0.0
          %1688 = vmatpush1.msra.mxu0 %v1662
          %1689 = vmatprep.subr.mxu0 0.0
          %1690 = vmatpush1.msra.mxu0 %v1663
          %1691 = vmatprep.subr.mxu0 0.0
          %1692 = vmatpush1.msra.mxu0 %v1664
          %1693 = vmatprep.subr.mxu0 0.0
          %1694 = vmatpush1.msra.mxu0 %v1665
          %1695 = vmatprep.subr.mxu0 0.0
          %1696 = vmatpush1.msra.mxu0 %v1666
          %1697 = vmatprep.subr.mxu0 0.0
          %1698 = vmatpush1.msra.mxu0 %v1667
          %1699 = vmatprep.subr.mxu0 0.0
          %1700 = vmatpush1.msra.mxu0 %v1668
          %1701 = vmatprep.subr.mxu0 0.0
          %1702 = vmatpush1.msra.mxu0 %v1669
          %1703 = vmatprep.subr.mxu0 0.0
          %1704 = vmatpush1.msra.mxu0 %v1670
          %1705 = vmatprep.subr.mxu0 0.0
          %1706 = vmatpush1.msra.mxu0 %v1671
          %1707 = vmatprep.subr.mxu0 0.0
          %1708 = vmatpush1.msra.mxu0 %v1672
          %1709 = vmatprep.subr.mxu0 0.0
          %1710 = vmatpush1.msra.mxu0 %v1673
          %1711 = vmatprep.subr.mxu0 0.0
          %1712 = vmatpush1.msra.mxu0 %v1674
          %1713 = vmatprep.subr.mxu0 0.0
          %1714 = vmatpush1.msra.mxu0 %v1675
          %1715 = vmatprep.subr.mxu0 0.0
          %1716 = vmatpush1.msra.mxu0 0.0
          %1717 = vmatprep.subr.mxu0 0.0
          %1718 = vmatpush1.msra.mxu0 0.0
          %1719 = vmatprep.subr.mxu0 0.0
          %1720 = vmatpush1.msra.mxu0 0.0
          %1721 = vmatprep.subr.mxu0 0.0
          %1722 = vmatpush1.msra.mxu0 0.0
          %1723 = vmatprep.subr.mxu0 0.0
          %1724 = vmatpush1.msra.mxu0 0.0
          %1725 = vmatprep.subr.mxu0 0.0
          %1726 = vmatpush1.msra.mxu0 0.0
          %1727 = vmatprep.subr.mxu0 0.0
          %1728 = vmatpush1.msra.mxu0 0.0
          %1729 = vmatprep.subr.mxu0 0.0
          %1730 = vmatpush1.msra.mxu0 0.0
          %1731 = vmatprep.subr.mxu0 0.0
          %1732 = vmatpush1.msra.mxu0 0.0
          %1733 = vmatprep.subr.mxu0 0.0
          %1734 = vmatpush1.msra.mxu0 0.0
          %1735 = vmatprep.subr.mxu0 0.0
          %1736 = vmatpush1.msra.mxu0 0.0
          %1737 = vmatprep.subr.mxu0 0.0
          %1738 = vmatpush1.msra.mxu0 0.0
          %1739 = vmatprep.subr.mxu0 0.0
          %1740 = vmatpush1.msra.mxu0 0.0
          %1741 = vmatprep.subr.mxu0 0.0
          %1742 = vmatpush1.msra.mxu0 0.0
          %1743 = vmatprep.subr.mxu0 0.0
          %1744 = vmatpush1.msra.mxu0 0.0
          %1745 = vmatprep.subr.mxu0 0.0
          %1746 = vmatpush1.msra.mxu0 0.0
          %1747 = vmatprep.mubr.f32.mxu0 0.0
          %1748 = vmatmul.mubr.f32.gmra.mrb[0].mxu0 %v1659
          %v1749 = vpop.f32.mrb[0].mxu0
          %v1750 = vadd.f32 %v1681, %v1749
          %v1751 = vpop.f32.mrb[0].mxu0
          %1752 = vdwg.mxu0
          %v1753 = vmax.f32 %v1750, 0.0
          %v1754 = vmin.f32 %v1753, 1.0
          %v1755 = vld [vmem:[%s5] sm:$0xff]
          %v1756 = vld [vmem:[%s5 + $0x8] sm:$0xff]
          %v1757 = vld [vmem:[%s5 + $0x10] sm:$0xff]
          %v1758 = vld [vmem:[%s5 + $0x18] sm:$0xff]
          %v1759 = vld [vmem:[%s5 + $0x20] sm:$0xff]
          %v1760 = vld [vmem:[%s5 + $0x28] sm:$0xff]
          %v1761 = vld [vmem:[%s5 + $0x30] sm:$0xff]
          %v1762 = vld [vmem:[%s5 + $0x38] sm:$0xff]
          %v1763 = vld [vmem:[%s6] sm:$0x1]
          %v1765 = vlaneseq
          %v1766 = vshrl.u32 %v1765, 7
          %v1767 = vsub.s32 0, %v1766
          %v1768 = vrot.slane %v1763, %v1767
          %vm1770 = vcmask 523264
          %v1772 = vsel %vm1770, %v1754, 0
          %1774 = vmatprep.subr.mxu0 0.0
          %1775 = vmatpush1.msra.mxu0 %v1755
          %1776 = vmatprep.subr.mxu0 0.0
          %1777 = vmatpush1.msra.mxu0 %v1756
          %1778 = vmatprep.subr.mxu0 0.0
          %1779 = vmatpush1.msra.mxu0 %v1757
          %1780 = vmatprep.subr.mxu0 0.0
          %1781 = vmatpush1.msra.mxu0 %v1758
          %1782 = vmatprep.subr.mxu0 0.0
          %1783 = vmatpush1.msra.mxu0 %v1759
          %1784 = vmatprep.subr.mxu0 0.0
          %1785 = vmatpush1.msra.mxu0 %v1760
          %1786 = vmatprep.subr.mxu0 0.0
          %1787 = vmatpush1.msra.mxu0 %v1761
          %1788 = vmatprep.subr.mxu0 0.0
          %1789 = vmatpush1.msra.mxu0 %v1762
          %1790 = vmatprep.subr.mxu0 0.0
          %1791 = vmatpush1.msra.mxu0 0.0
          %1792 = vmatprep.subr.mxu0 0.0
          %1793 = vmatpush1.msra.mxu0 0.0
          %1794 = vmatprep.subr.mxu0 0.0
          %1795 = vmatpush1.msra.mxu0 0.0
          %1796 = vmatprep.subr.mxu0 0.0
          %1797 = vmatpush1.msra.mxu0 0.0
          %1798 = vmatprep.subr.mxu0 0.0
          %1799 = vmatpush1.msra.mxu0 0.0
          %1800 = vmatprep.subr.mxu0 0.0
          %1801 = vmatpush1.msra.mxu0 0.0
          %1802 = vmatprep.subr.mxu0 0.0
          %1803 = vmatpush1.msra.mxu0 0.0
          %1804 = vmatprep.subr.mxu0 0.0
          %1805 = vmatpush1.msra.mxu0 0.0
          %1806 = vmatprep.subr.mxu0 0.0
          %1807 = vmatpush1.msra.mxu0 0.0
          %1808 = vmatprep.subr.mxu0 0.0
          %1809 = vmatpush1.msra.mxu0 0.0
          %1810 = vmatprep.subr.mxu0 0.0
          %1811 = vmatpush1.msra.mxu0 0.0
          %1812 = vmatprep.subr.mxu0 0.0
          %1813 = vmatpush1.msra.mxu0 0.0
          %1814 = vmatprep.subr.mxu0 0.0
          %1815 = vmatpush1.msra.mxu0 0.0
          %1816 = vmatprep.subr.mxu0 0.0
          %1817 = vmatpush1.msra.mxu0 0.0
          %1818 = vmatprep.subr.mxu0 0.0
          %1819 = vmatpush1.msra.mxu0 0.0
          %1820 = vmatprep.subr.mxu0 0.0
          %1821 = vmatpush1.msra.mxu0 0.0
          %1822 = vmatprep.subr.mxu0 0.0
          %1823 = vmatpush1.msra.mxu0 0.0
          %1824 = vmatprep.subr.mxu0 0.0
          %1825 = vmatpush1.msra.mxu0 0.0
          %1826 = vmatprep.subr.mxu0 0.0
          %1827 = vmatpush1.msra.mxu0 0.0
          %1828 = vmatprep.subr.mxu0 0.0
          %1829 = vmatpush1.msra.mxu0 0.0
          %1830 = vmatprep.subr.mxu0 0.0
          %1831 = vmatpush1.msra.mxu0 0.0
          %1832 = vmatprep.subr.mxu0 0.0
          %1833 = vmatpush1.msra.mxu0 0.0
          %1834 = vmatprep.subr.mxu0 0.0
          %1835 = vmatpush1.msra.mxu0 0.0
          %1836 = vmatprep.subr.mxu0 0.0
          %1837 = vmatpush1.msra.mxu0 0.0
          %1838 = vmatprep.mubr.f32.mxu0 0.0
          %1839 = vmatmul.mubr.f32.gmra.mrb[0].mxu0 %v1772
          %v1840 = vpop.f32.mrb[0].mxu0
          %v1841 = vadd.f32 %v1768, %v1840
          %v1842 = vpop.f32.mrb[0].mxu0
          %1843 = vdwg.mxu0
          %v1844 = vmax.f32 %v1841, 0.0
          %v1845 = vmin.f32 %v1844, 1.0
          %v1846 = vld [vmem:[%s7] sm:$0xff]
          %v1847 = vld [vmem:[%s7 + $0x8] sm:$0xff]
          %v1848 = vld [vmem:[%s7 + $0x10] sm:$0xff]
          %v1849 = vld [vmem:[%s7 + $0x18] sm:$0xff]
          %v1850 = vld [vmem:[#allocation3] sm:$0x1]
          %v1852 = vlaneseq
          %v1853 = vshrl.u32 %v1852, 7
          %v1854 = vsub.s32 0, %v1853
          %v1855 = vrot.slane %v1850, %v1854
          %vm1857 = vcmask 261120
          %v1859 = vsel %vm1857, %v1845, 0
          %1861 = vmatprep.subr.mxu0 0.0
          %1862 = vmatpush1.msra.mxu0 %v1846
          %1863 = vmatprep.subr.mxu0 0.0
          %1864 = vmatpush1.msra.mxu0 %v1847
          %1865 = vmatprep.subr.mxu0 0.0
          %1866 = vmatpush1.msra.mxu0 %v1848
          %1867 = vmatprep.subr.mxu0 0.0
          %1868 = vmatpush1.msra.mxu0 %v1849
          %1869 = vmatprep.subr.mxu0 0.0
          %1870 = vmatpush1.msra.mxu0 0.0
          %1871 = vmatprep.subr.mxu0 0.0
          %1872 = vmatpush1.msra.mxu0 0.0
          %1873 = vmatprep.subr.mxu0 0.0
          %1874 = vmatpush1.msra.mxu0 0.0
          %1875 = vmatprep.subr.mxu0 0.0
          %1876 = vmatpush1.msra.mxu0 0.0
          %1877 = vmatprep.subr.mxu0 0.0
          %1878 = vmatpush1.msra.mxu0 0.0
          %1879 = vmatprep.subr.mxu0 0.0
          %1880 = vmatpush1.msra.mxu0 0.0
          %1881 = vmatprep.subr.mxu0 0.0
          %1882 = vmatpush1.msra.mxu0 0.0
          %1883 = vmatprep.subr.mxu0 0.0
          %1884 = vmatpush1.msra.mxu0 0.0
          %1885 = vmatprep.subr.mxu0 0.0
          %1886 = vmatpush1.msra.mxu0 0.0
          %1887 = vmatprep.subr.mxu0 0.0
          %1888 = vmatpush1.msra.mxu0 0.0
          %1889 = vmatprep.subr.mxu0 0.0
          %1890 = vmatpush1.msra.mxu0 0.0
          %1891 = vmatprep.subr.mxu0 0.0
          %1892 = vmatpush1.msra.mxu0 0.0
          %1893 = vmatprep.subr.mxu0 0.0
          %1894 = vmatpush1.msra.mxu0 0.0
          %1895 = vmatprep.subr.mxu0 0.0
          %1896 = vmatpush1.msra.mxu0 0.0
          %1897 = vmatprep.subr.mxu0 0.0
          %1898 = vmatpush1.msra.mxu0 0.0
          %1899 = vmatprep.subr.mxu0 0.0
          %1900 = vmatpush1.msra.mxu0 0.0
          %1901 = vmatprep.subr.mxu0 0.0
          %1902 = vmatpush1.msra.mxu0 0.0
          %1903 = vmatprep.subr.mxu0 0.0
          %1904 = vmatpush1.msra.mxu0 0.0
          %1905 = vmatprep.subr.mxu0 0.0
          %1906 = vmatpush1.msra.mxu0 0.0
          %1907 = vmatprep.subr.mxu0 0.0
          %1908 = vmatpush1.msra.mxu0 0.0
          %1909 = vmatprep.subr.mxu0 0.0
          %1910 = vmatpush1.msra.mxu0 0.0
          %1911 = vmatprep.subr.mxu0 0.0
          %1912 = vmatpush1.msra.mxu0 0.0
          %1913 = vmatprep.subr.mxu0 0.0
          %1914 = vmatpush1.msra.mxu0 0.0
          %1915 = vmatprep.subr.mxu0 0.0
          %1916 = vmatpush1.msra.mxu0 0.0
          %1917 = vmatprep.subr.mxu0 0.0
          %1918 = vmatpush1.msra.mxu0 0.0
          %1919 = vmatprep.subr.mxu0 0.0
          %1920 = vmatpush1.msra.mxu0 0.0
          %1921 = vmatprep.subr.mxu0 0.0
          %1922 = vmatpush1.msra.mxu0 0.0
          %1923 = vmatprep.subr.mxu0 0.0
          %1924 = vmatpush1.msra.mxu0 0.0
          %1925 = vmatprep.mubr.f32.mxu0 0.0
          %1926 = vmatmul.mubr.f32.gmra.mrb[0].mxu0 %v1859
          %v1927 = vpop.f32.mrb[0].mxu0
          %v1928 = vadd.f32 %v1855, %v1927
          %v1929 = vpop.f32.mrb[0].mxu0
          %1930 = vdwg.mxu0
          %vm1931 = vcmask 7168
          %1932 = vst.msk [vmem:[%s9] sm:$0xff] %vm1931, %v1928
        $region72: #{tpu_custom_call.1} parent=55 // pred_fallthru
          _
        // Predicated region
        $region73: #{tpu_custom_call.1} parent=55 // pred_check
          %p1933 = pneg %p237
        $region74: #{tpu_custom_call.1} parent=55 // pred_check_branch
          %1935 = sbr.rel (%p1933) target = $region76
        $region75: #{tpu_custom_call.1} parent=55 // pred_region
          _
        $region76: #{tpu_custom_call.1} parent=55 // pred_fallthru
          _
        // Predicated region
        $region77: #{tpu_custom_call.1} parent=55 // pred_check
          %p1936 = pneg %p237
        $region78: #{tpu_custom_call.1} parent=55 // pred_check_branch
          %1938 = sbr.rel (%p1936) target = $region80
        $region79: #{tpu_custom_call.1} parent=55 // pred_region
          _
        $region80: #{tpu_custom_call.1} parent=55 // pred_fallthru
          _
      $region56: #{tpu_custom_call.1} parent=5 // pred_fallthru
        _
      %p1939 = scmp.le.s32.totalorder 2, %s20
      // Predicated region
      $region81: #{tpu_custom_call.1} parent=5 // pred_check
        %p1940 = pneg %p1939
      $region82: #{tpu_custom_call.1} parent=5 // pred_check_branch
        %1942 = sbr.rel (%p1940) target = $region84
      $region83: #{tpu_custom_call.1} parent=5 // pred_region
        %s1943 = ssub.s32 %s20, 2
      $region84: #{tpu_custom_call.1} parent=5 // pred_fallthru
        _
    $region6: #{tpu_custom_call.1} parent=1 // loop_footer
      %s24 = sadd.s32 1, %s20
    $region7: #{tpu_custom_call.1} parent=1 // loop_footer_branch
      %19 = sbr.rel target = $region3
    $region8: #{tpu_custom_call.1} parent=1 // loop_exit
      _
    %1944 = vsyncpa [#allocation5], 1
    %s1945 = scalar_lea.sflag [#allocation5], 1
    %1946 = vsyncpa %s1945, 1

</llo_original>
